<compile_context>
chip_gen: v6e
topology: v6e:2x2x1
jax: 0.10.0
libtpu: 0.0.40
codegen_flags: <defaults>
</compile_context>

<pallas_src>
import jax
import jax.numpy as jnp
from jax.experimental import pallas as pl
from jax.experimental.pallas import tpu as pltpu


def _dwconv_kernel(x_ref, w_ref, b_ref, o_ref):
    """One grid step = one full image of one batch element.

    x_ref: (1, H, W, C)   input tile, channels on lanes
    w_ref: (9, C)         depthwise weights, row k = dh*3 + dw
    b_ref: (1, C)         bias
    o_ref: (1, H, W, C)   output tile
    """
    _, H, W, C = x_ref.shape
    xf = x_ref[0].astype(jnp.float32)                        # (H, W, C)

    # Build the zero halo (padding=1) entirely in VMEM — no HBM pad pass.
    zrow = jnp.zeros((1, W, C), jnp.float32)
    xp = jnp.concatenate([zrow, xf, zrow], axis=0)           # (H+2, W, C)
    zcol = jnp.zeros((H + 2, 1, C), jnp.float32)
    xp = jnp.concatenate([zcol, xp, zcol], axis=1)           # (H+2, W+2, C)

    w = w_ref[...].astype(jnp.float32)                       # (9, C)

    acc = jnp.zeros((H, W, C), jnp.float32)
    for dh in range(3):
        for dw in range(3):
            tap = w[dh * 3 + dw].reshape(1, 1, C)            # per-channel weight
            acc = acc + xp[dh:dh + H, dw:dw + W, :] * tap
    acc = acc + b_ref[0].astype(jnp.float32).reshape(1, 1, C)

    o_ref[0] = acc.astype(o_ref.dtype)


def dwconv_pallas(x, weight, bias, H, W):
    """DWConv forward.

    x:      (B, N, C) with N == H * W
    weight: (C, 1, 3, 3)  (PyTorch depthwise Conv2d layout)
    bias:   (C,)
    returns (B, N, C)
    """
    B, N, C = x.shape
    assert N == H * W, "N must equal H * W"

    x_bhwc = x.reshape(B, H, W, C)                            # free reshape, channels-last
    w9c = jnp.transpose(weight[:, 0].reshape(C, 9), (1, 0))   # (9, C), row = dh*3+dw
    b1c = bias.reshape(1, C)

    out = pl.pallas_call(
        _dwconv_kernel,
        out_shape=jax.ShapeDtypeStruct((B, H, W, C), x.dtype),
        grid=(B,),
        in_specs=[
            pl.BlockSpec((1, H, W, C), lambda b: (b, 0, 0, 0)),
            pl.BlockSpec((9, C), lambda b: (0, 0)),
            pl.BlockSpec((1, C), lambda b: (0, 0)),
        ],
        out_specs=pl.BlockSpec((1, H, W, C), lambda b: (b, 0, 0, 0)),
        compiler_params=pltpu.CompilerParams(
            # Batch axis is independent -> shards across the 2 TCs on v7x.
            dimension_semantics=("parallel",),
        ),
    )(x_bhwc, w9c, b1c)

    # TODO(synk): for very large feature maps (per-image block approaching the
    # VMEM budget, especially v7x's 64 MiB), add halo-tiled blocking over H.
    return out.reshape(B, N, C)


def dwconv_reference(x, weight, bias, H, W):
    """Pure-JAX reference matching nn.Conv2d(dim, dim, 3, 1, 1, bias=True, groups=dim)."""
    B, N, C = x.shape
    x_bhwc = x.reshape(B, H, W, C)
    w_hwio = jnp.transpose(weight, (2, 3, 1, 0))              # (3, 3, 1, C)
    out = jax.lax.conv_general_dilated(
        x_bhwc, w_hwio,
        window_strides=(1, 1), padding=((1, 1), (1, 1)),
        dimension_numbers=("NHWC", "HWIO", "NHWC"),
        feature_group_count=C,
        precision=jax.lax.Precision.HIGHEST)
    out = out + bias.reshape(1, 1, 1, C)
    return out.reshape(B, N, C)


if __name__ == "__main__":
    key = jax.random.PRNGKey(0)
    kx, kw, kb = jax.random.split(key, 3)

    B, H, W, C = 2, 16, 16, 64
    N = H * W
    x = jax.random.normal(kx, (B, N, C), dtype=jnp.float32)
    weight = jax.random.normal(kw, (C, 1, 3, 3), dtype=jnp.float32) * 0.1
    bias = jax.random.normal(kb, (C,), dtype=jnp.float32) * 0.1

    out = dwconv_pallas(x, weight, bias, H, W)
    jax.block_until_ready(out)

    ref = dwconv_reference(x, weight, bias, H, W)
    assert out.shape == (B, N, C) and out.dtype == x.dtype
    assert jnp.allclose(out, ref, atol=1e-5, rtol=1e-5), float(jnp.max(jnp.abs(out - ref)))

    print("KERNEL_OK")
</pallas_src>

<mosaic_0001>
module attributes {stable_mosaic.version = 11 : i64} {
  func.func @_dwconv_kernel(%arg0: i32, %arg1: memref<1x16x16x64xf32, #tpu.memory_space<vmem>>, %arg2: memref<9x64xf32, #tpu.memory_space<vmem>>, %arg3: memref<1x64xf32, #tpu.memory_space<vmem>>, %arg4: memref<1x16x16x64xf32, #tpu.memory_space<vmem>>) attributes {dimension_semantics = [#tpu.dimension_semantics<parallel>], iteration_bounds = array<i64: 2>, scalar_prefetch = 0 : i64, scratch_operands = 0 : i64, tpu.core_type = #tpu.core_type<tc>, window_params = [{transform_indices = @transform_0, window_bounds = array<i64: 1, 16, 16, 64>}, {pipeline_mode = #tpu.pipeline_mode<synchronous>, transform_indices = @transform_1, window_bounds = array<i64: 9, 64>}, {pipeline_mode = #tpu.pipeline_mode<synchronous>, transform_indices = @transform_2, window_bounds = array<i64: 1, 64>}, {transform_indices = @transform_3, window_bounds = array<i64: 1, 16, 16, 64>}]} {
    %c0 = arith.constant 0 : index
    %c0_0 = arith.constant 0 : index
    %c0_1 = arith.constant 0 : index
    %c0_2 = arith.constant 0 : index
    %0 = vector.load %arg1[%c0, %c0_0, %c0_1, %c0_2] : memref<1x16x16x64xf32, #tpu.memory_space<vmem>>, vector<1x16x16x64xf32>
    %1 = vector.shape_cast %0 : vector<1x16x16x64xf32> to vector<16x16x64xf32>
    %cst = arith.constant 0.000000e+00 : f32
    %2 = vector.broadcast %cst : f32 to vector<1x16x64xf32>
    %3 = tpu.concatenate %2, %1, %2 in 0 : vector<1x16x64xf32>, vector<16x16x64xf32>, vector<1x16x64xf32> -> vector<18x16x64xf32>
    %cst_3 = arith.constant 0.000000e+00 : f32
    %4 = vector.broadcast %cst_3 : f32 to vector<18x1x64xf32>
    %5 = tpu.concatenate %4, %3, %4 in 1 : vector<18x1x64xf32>, vector<18x16x64xf32>, vector<18x1x64xf32> -> vector<18x18x64xf32>
    %c0_4 = arith.constant 0 : index
    %c0_5 = arith.constant 0 : index
    %6 = vector.load %arg2[%c0_4, %c0_5] : memref<9x64xf32, #tpu.memory_space<vmem>>, vector<9x64xf32>
    %cst_6 = arith.constant 0.000000e+00 : f32
    %7 = vector.broadcast %cst_6 : f32 to vector<16x16x64xf32>
    %8 = vector.extract_strided_slice %6 {offsets = [0, 0], sizes = [1, 64], strides = [1, 1]} : vector<9x64xf32> to vector<1x64xf32>
    %9 = vector.shape_cast %8 : vector<1x64xf32> to vector<64xf32>
    %10 = vector.shape_cast %9 : vector<64xf32> to vector<1x1x64xf32>
    %11 = vector.extract_strided_slice %5 {offsets = [0, 0, 0], sizes = [16, 16, 64], strides = [1, 1, 1]} : vector<18x18x64xf32> to vector<16x16x64xf32>
    %12 = vector.broadcast %10 : vector<1x1x64xf32> to vector<16x16x64xf32>
    %13 = arith.mulf %11, %12 : vector<16x16x64xf32>
    %14 = arith.addf %7, %13 : vector<16x16x64xf32>
    %15 = vector.extract_strided_slice %6 {offsets = [1, 0], sizes = [1, 64], strides = [1, 1]} : vector<9x64xf32> to vector<1x64xf32>
    %16 = vector.shape_cast %15 : vector<1x64xf32> to vector<64xf32>
    %17 = vector.shape_cast %16 : vector<64xf32> to vector<1x1x64xf32>
    %18 = vector.extract_strided_slice %5 {offsets = [0, 1, 0], sizes = [16, 16, 64], strides = [1, 1, 1]} : vector<18x18x64xf32> to vector<16x16x64xf32>
    %19 = vector.broadcast %17 : vector<1x1x64xf32> to vector<16x16x64xf32>
    %20 = arith.mulf %18, %19 : vector<16x16x64xf32>
    %21 = arith.addf %14, %20 : vector<16x16x64xf32>
    %22 = vector.extract_strided_slice %6 {offsets = [2, 0], sizes = [1, 64], strides = [1, 1]} : vector<9x64xf32> to vector<1x64xf32>
    %23 = vector.shape_cast %22 : vector<1x64xf32> to vector<64xf32>
    %24 = vector.shape_cast %23 : vector<64xf32> to vector<1x1x64xf32>
    %25 = vector.extract_strided_slice %5 {offsets = [0, 2, 0], sizes = [16, 16, 64], strides = [1, 1, 1]} : vector<18x18x64xf32> to vector<16x16x64xf32>
    %26 = vector.broadcast %24 : vector<1x1x64xf32> to vector<16x16x64xf32>
    %27 = arith.mulf %25, %26 : vector<16x16x64xf32>
    %28 = arith.addf %21, %27 : vector<16x16x64xf32>
    %29 = vector.extract_strided_slice %6 {offsets = [3, 0], sizes = [1, 64], strides = [1, 1]} : vector<9x64xf32> to vector<1x64xf32>
    %30 = vector.shape_cast %29 : vector<1x64xf32> to vector<64xf32>
    %31 = vector.shape_cast %30 : vector<64xf32> to vector<1x1x64xf32>
    %32 = vector.extract_strided_slice %5 {offsets = [1, 0, 0], sizes = [16, 16, 64], strides = [1, 1, 1]} : vector<18x18x64xf32> to vector<16x16x64xf32>
    %33 = vector.broadcast %31 : vector<1x1x64xf32> to vector<16x16x64xf32>
    %34 = arith.mulf %32, %33 : vector<16x16x64xf32>
    %35 = arith.addf %28, %34 : vector<16x16x64xf32>
    %36 = vector.extract_strided_slice %6 {offsets = [4, 0], sizes = [1, 64], strides = [1, 1]} : vector<9x64xf32> to vector<1x64xf32>
    %37 = vector.shape_cast %36 : vector<1x64xf32> to vector<64xf32>
    %38 = vector.shape_cast %37 : vector<64xf32> to vector<1x1x64xf32>
    %39 = vector.extract_strided_slice %5 {offsets = [1, 1, 0], sizes = [16, 16, 64], strides = [1, 1, 1]} : vector<18x18x64xf32> to vector<16x16x64xf32>
    %40 = vector.broadcast %38 : vector<1x1x64xf32> to vector<16x16x64xf32>
    %41 = arith.mulf %39, %40 : vector<16x16x64xf32>
    %42 = arith.addf %35, %41 : vector<16x16x64xf32>
    %43 = vector.extract_strided_slice %6 {offsets = [5, 0], sizes = [1, 64], strides = [1, 1]} : vector<9x64xf32> to vector<1x64xf32>
    %44 = vector.shape_cast %43 : vector<1x64xf32> to vector<64xf32>
    %45 = vector.shape_cast %44 : vector<64xf32> to vector<1x1x64xf32>
    %46 = vector.extract_strided_slice %5 {offsets = [1, 2, 0], sizes = [16, 16, 64], strides = [1, 1, 1]} : vector<18x18x64xf32> to vector<16x16x64xf32>
    %47 = vector.broadcast %45 : vector<1x1x64xf32> to vector<16x16x64xf32>
    %48 = arith.mulf %46, %47 : vector<16x16x64xf32>
    %49 = arith.addf %42, %48 : vector<16x16x64xf32>
    %50 = vector.extract_strided_slice %6 {offsets = [6, 0], sizes = [1, 64], strides = [1, 1]} : vector<9x64xf32> to vector<1x64xf32>
    %51 = vector.shape_cast %50 : vector<1x64xf32> to vector<64xf32>
    %52 = vector.shape_cast %51 : vector<64xf32> to vector<1x1x64xf32>
    %53 = vector.extract_strided_slice %5 {offsets = [2, 0, 0], sizes = [16, 16, 64], strides = [1, 1, 1]} : vector<18x18x64xf32> to vector<16x16x64xf32>
    %54 = vector.broadcast %52 : vector<1x1x64xf32> to vector<16x16x64xf32>
    %55 = arith.mulf %53, %54 : vector<16x16x64xf32>
    %56 = arith.addf %49, %55 : vector<16x16x64xf32>
    %57 = vector.extract_strided_slice %6 {offsets = [7, 0], sizes = [1, 64], strides = [1, 1]} : vector<9x64xf32> to vector<1x64xf32>
    %58 = vector.shape_cast %57 : vector<1x64xf32> to vector<64xf32>
    %59 = vector.shape_cast %58 : vector<64xf32> to vector<1x1x64xf32>
    %60 = vector.extract_strided_slice %5 {offsets = [2, 1, 0], sizes = [16, 16, 64], strides = [1, 1, 1]} : vector<18x18x64xf32> to vector<16x16x64xf32>
    %61 = vector.broadcast %59 : vector<1x1x64xf32> to vector<16x16x64xf32>
    %62 = arith.mulf %60, %61 : vector<16x16x64xf32>
    %63 = arith.addf %56, %62 : vector<16x16x64xf32>
    %64 = vector.extract_strided_slice %6 {offsets = [8, 0], sizes = [1, 64], strides = [1, 1]} : vector<9x64xf32> to vector<1x64xf32>
    %65 = vector.shape_cast %64 : vector<1x64xf32> to vector<64xf32>
    %66 = vector.shape_cast %65 : vector<64xf32> to vector<1x1x64xf32>
    %67 = vector.extract_strided_slice %5 {offsets = [2, 2, 0], sizes = [16, 16, 64], strides = [1, 1, 1]} : vector<18x18x64xf32> to vector<16x16x64xf32>
    %68 = vector.broadcast %66 : vector<1x1x64xf32> to vector<16x16x64xf32>
    %69 = arith.mulf %67, %68 : vector<16x16x64xf32>
    %70 = arith.addf %63, %69 : vector<16x16x64xf32>
    %c0_7 = arith.constant 0 : index
    %c0_8 = arith.constant 0 : index
    %71 = vector.load %arg3[%c0_7, %c0_8] : memref<1x64xf32, #tpu.memory_space<vmem>>, vector<1x64xf32>
    %72 = vector.shape_cast %71 : vector<1x64xf32> to vector<64xf32>
    %73 = vector.shape_cast %72 : vector<64xf32> to vector<1x1x64xf32>
    %74 = vector.broadcast %73 : vector<1x1x64xf32> to vector<16x16x64xf32>
    %75 = arith.addf %70, %74 : vector<16x16x64xf32>
    %c0_9 = arith.constant 0 : index
    %c0_10 = arith.constant 0 : index
    %c0_11 = arith.constant 0 : index
    %c0_12 = arith.constant 0 : index
    %76 = vector.load %arg4[%c0_9, %c0_10, %c0_11, %c0_12] : memref<1x16x16x64xf32, #tpu.memory_space<vmem>>, vector<1x16x16x64xf32>
    %77 = vector.shape_cast %76 : vector<1x16x16x64xf32> to vector<16x16x64xf32>
    %78 = vector.shape_cast %75 : vector<16x16x64xf32> to vector<1x16x16x64xf32>
    tpu.vector_store %arg4[%c0_9, %c0_10, %c0_11, %c0_12], %78 {strides = array<i32>} : memref<1x16x16x64xf32, #tpu.memory_space<vmem>>, vector<1x16x16x64xf32>,
    return
  }
  func.func @transform_0(%arg0: i32) -> (i32, i32, i32, i32) {
    %c0_i32 = arith.constant 0 : i32
    %c0_i32_0 = arith.constant 0 : i32
    %c0_i32_1 = arith.constant 0 : i32
    %c0_i32_2 = arith.constant 0 : i32
    return %arg0, %c0_i32, %c0_i32_0, %c0_i32_1 : i32, i32, i32, i32
  }
  func.func @transform_1(%arg0: i32) -> (i32, i32) {
    %c0_i32 = arith.constant 0 : i32
    %c0_i32_0 = arith.constant 0 : i32
    %c0_i32_1 = arith.constant 0 : i32
    return %c0_i32, %c0_i32_0 : i32, i32
  }
  func.func @transform_2(%arg0: i32) -> (i32, i32) {
    %c0_i32 = arith.constant 0 : i32
    %c0_i32_0 = arith.constant 0 : i32
    %c0_i32_1 = arith.constant 0 : i32
    return %c0_i32, %c0_i32_0 : i32, i32
  }
  func.func @transform_3(%arg0: i32) -> (i32, i32, i32, i32) {
    %c0_i32 = arith.constant 0 : i32
    %c0_i32_0 = arith.constant 0 : i32
    %c0_i32_1 = arith.constant 0 : i32
    %c0_i32_2 = arith.constant 0 : i32
    return %arg0, %c0_i32, %c0_i32_0, %c0_i32_1 : i32, i32, i32, i32
  }
}

</mosaic_0001>

<llo_original>
// kernel: tpu_custom_call.1
$region0: #{tpu_custom_call.1}
  #allocation0 [shape = 'u32[]', space=smem, size = 0x4, offset = 0x4, fixed_abs, tag = 'smem constant byte address 0x4 - core index']
  #allocation1 [shape = 'u32[144,128]{1,0:T(1,128)}', space=vmem, size = 0x12000, scoped, tag = 'internal scratch']
  %s0 = inlined_call_operand.hbm [shape: f32[2,16,16,64], index: 0, kind: input, shape index: {}]
  %s1 = inlined_call_operand.hbm [shape: f32[9,64], index: 1, kind: input, shape index: {}]
  %s2 = inlined_call_operand.vmem [shape: f32[1,64], index: 2, kind: input, shape index: {}]
  %s3 = inlined_call_operand.hbm [shape: f32[2,16,16,64], index: 3, kind: output, shape index: {}]
  %s4 = sld [smem:[#allocation0]]
  $region53: #{tpu_custom_call.1} parent=0
    _
  %s6 = ssub.s32 1, %s4
  %s7 = scalar_select 0, %s6, %s4
  $region1: #{tpu_custom_call.1} parent=0
    #allocation2 [shape = 'u8[262144]{0}', space=vmem, size = 0x40000, scoped, tag = 'input window, operand 0']
    #allocation3 [shape = 's32[2]{0}', space=sflag, size = 0x8, scoped, tag = 'scoped memory for tpu_custom_call.1']
    #allocation4 [shape = 's32[2]{0}', space=sflag, size = 0x8, scoped, tag = 'scoped memory for tpu_custom_call.1']
    #allocation5 [shape = 'u8[8192]{0}', space=vmem, size = 0x2000, scoped, tag = 'input window, operand 1, single buffered']
    #allocation6 [shape = 's32[1]{0}', space=sflag, size = 0x4, scoped, tag = 'scoped memory for tpu_custom_call.1']
    #allocation7 [shape = 'u8[262144]{0}', space=vmem, size = 0x40000, scoped, tag = 'output window, operand 0']
    %8 = vsyncpa [#allocation3], 0
    %s9 = scalar_lea.sflag [#allocation3], 1
    %10 = vsyncpa %s9, 0
    %11 = vsyncpa [#allocation6], 0
    %12 = vsyncpa [#allocation4], 0
    %s13 = scalar_lea.sflag [#allocation4], 1
    %14 = vsyncpa %s13, 0
    loop: start=0, step=1, limit=4
    $region2: #{tpu_custom_call.1} parent=1 // loop_pre_header
      _
    $region3: #{tpu_custom_call.1} parent=1 // loop_header
      %s16 = sphi 0, %s20
      %p17 = scmp.ge.s32.totalorder %s16, 4
      %s26 = sphi 0, %s28
      %s29 = sphi 0, %s26
      %s30 = sphi 0, %s29
      %s46 = sphi 0, %s30
      %s50 = sphi 0, %s50
      %s52 = sphi 0, %s50
      %s53 = sphi 0, %s52
      %s67 = sphi 0, %s53
      %s71 = sphi 0, %s71
      %s73 = sphi 0, %s71
      %s74 = sphi 0, %s73
      %s88 = sphi 0, %s74
      %s94 = sphi 0, %s96
      %s97 = sphi 0, %s94
      %s98 = sphi 0, %s97
      %s114 = sphi 0, %s98
    $region4: #{tpu_custom_call.1} parent=1 // loop_header_branch
      %19 = sbr.rel (%p17) target = $region8
    $region5: #{tpu_custom_call.1} parent=1 // loop_body
      %s21 = ssub.s32 %s16, 1
      %s22 = ssub.s32 %s16, 2
      %s23 = sadd.s32 %s16, 1
      %s24 = ssub.s32 %s16, %s23
      %p25 = scmp.eq.s32.totalorder %s24, 0
      %s27 = sadd.s32 %s26, 1
      %s28 = scalar_select %p25, %s26, %s27
      %p31 = pneg %p25
      %p32 = scmp.eq.s32.totalorder %s16, 1
      %p33 = por %p31, %p32
      %p34 = scmp.ne.s32.totalorder %s26, %s29
      %p35 = scmp.eq.s32.totalorder %s16, 0
      %p36 = por %p34, %p35
      %p37 = scmp.ne.s32.totalorder %s26, %s29
      %p38 = scmp.eq.s32.totalorder %s21, 1
      %p39 = por %p37, %p38
      %p40 = scmp.ne.s32.totalorder %s29, %s30
      %p41 = scmp.eq.s32.totalorder %s21, 0
      %p42 = por %p40, %p41
      %p43 = scmp.ne.s32.totalorder %s29, %s30
      %p44 = scmp.eq.s32.totalorder %s22, 1
      %p45 = por %p43, %p44
      %p47 = scmp.ne.s32.totalorder %s30, %s46
      %p48 = scmp.eq.s32.totalorder %s22, 0
      %p49 = por %p47, %p48
      %s51 = sadd.s32 %s50, 1
      %p54 = scmp.eq.s32.totalorder %s16, 1
      %p55 = scmp.ne.s32.totalorder %s50, %s52
      %p56 = scmp.eq.s32.totalorder %s16, 0
      %p57 = por %p55, %p56
      %p58 = scmp.ne.s32.totalorder %s50, %s52
      %p59 = scmp.eq.s32.totalorder %s21, 1
      %p60 = por %p58, %p59
      %p61 = scmp.ne.s32.totalorder %s52, %s53
      %p62 = scmp.eq.s32.totalorder %s21, 0
      %p63 = por %p61, %p62
      %p64 = scmp.ne.s32.totalorder %s52, %s53
      %p65 = scmp.eq.s32.totalorder %s22, 1
      %p66 = por %p64, %p65
      %p68 = scmp.ne.s32.totalorder %s53, %s67
      %p69 = scmp.eq.s32.totalorder %s22, 0
      %p70 = por %p68, %p69
      %s72 = sadd.s32 %s71, 1
      %p75 = scmp.eq.s32.totalorder %s16, 1
      %p76 = scmp.ne.s32.totalorder %s71, %s73
      %p77 = scmp.eq.s32.totalorder %s16, 0
      %p78 = por %p76, %p77
      %p79 = scmp.ne.s32.totalorder %s71, %s73
      %p80 = scmp.eq.s32.totalorder %s21, 1
      %p81 = por %p79, %p80
      %p82 = scmp.ne.s32.totalorder %s73, %s74
      %p83 = scmp.eq.s32.totalorder %s21, 0
      %p84 = por %p82, %p83
      %p85 = scmp.ne.s32.totalorder %s73, %s74
      %p86 = scmp.eq.s32.totalorder %s22, 1
      %p87 = por %p85, %p86
      %p89 = scmp.ne.s32.totalorder %s74, %s88
      %p90 = scmp.eq.s32.totalorder %s22, 0
      %p91 = por %p89, %p90
      %s92 = ssub.s32 %s16, %s23
      %p93 = scmp.eq.s32.totalorder %s92, 0
      %s95 = sadd.s32 %s94, 1
      %s96 = scalar_select %p93, %s94, %s95
      %p99 = pneg %p93
      %p100 = scmp.eq.s32.totalorder %s16, 1
      %p101 = por %p99, %p100
      %p102 = scmp.ne.s32.totalorder %s94, %s97
      %p103 = scmp.eq.s32.totalorder %s16, 0
      %p104 = por %p102, %p103
      %p105 = scmp.ne.s32.totalorder %s94, %s97
      %p106 = scmp.eq.s32.totalorder %s21, 1
      %p107 = por %p105, %p106
      %p108 = scmp.ne.s32.totalorder %s97, %s98
      %p109 = scmp.eq.s32.totalorder %s21, 0
      %p110 = por %p108, %p109
      %p111 = scmp.ne.s32.totalorder %s97, %s98
      %p112 = scmp.eq.s32.totalorder %s22, 1
      %p113 = por %p111, %p112
      %p115 = scmp.ne.s32.totalorder %s98, %s114
      %p116 = scmp.eq.s32.totalorder %s22, 0
      %p117 = por %p115, %p116
      %p118 = scmp.le.s32.totalorder 1, %s16
      %p119 = scmp.lt.s32.totalorder %s16, 3
      %p120 = pnand %p118, %p119
      %p121 = pneg %p120
      // Predicated region
      $region9: #{tpu_custom_call.1} parent=5 // pred_check
        _
      $region10: #{tpu_custom_call.1} parent=5 // pred_check_branch
        %123 = sbr.rel (%p120) target = $region12
      $region11: #{tpu_custom_call.1} parent=5 // pred_region
        %s124 = ssub.s32 %s16, 1
        // Predicated region
        $region13: #{tpu_custom_call.1} parent=11 // pred_check
          %p125 = pneg %p63
        $region14: #{tpu_custom_call.1} parent=11 // pred_check_branch
          %127 = sbr.rel (%p125) target = $region16
        $region15: #{tpu_custom_call.1} parent=11 // pred_region
          %s129 = ssub.s32 256, 256
          %130 = vsyncadd [#allocation6], %s129
          %s131 = sshll.u32 [#allocation5], 4
          %s132 = int_to_ptr.vmem [resolvable:$true] %s131
          %137 = dma.hbm_to_vmem [thread:$0]  %s1, 256, %s132, [#allocation6], 128, 128, 8
        $region16: #{tpu_custom_call.1} parent=11 // pred_fallthru
          _
        // Predicated region
        $region17: #{tpu_custom_call.1} parent=11 // pred_check
          %p138 = pneg %p84
        $region18: #{tpu_custom_call.1} parent=11 // pred_check_branch
          %140 = sbr.rel (%p138) target = $region20
        $region19: #{tpu_custom_call.1} parent=11 // pred_region
          _
        $region20: #{tpu_custom_call.1} parent=11 // pred_fallthru
          _
      $region12: #{tpu_custom_call.1} parent=5 // pred_fallthru
        _
      %p141 = scmp.lt.s32.totalorder %s16, 2
      // Predicated region
      $region21: #{tpu_custom_call.1} parent=5 // pred_check
        %p142 = pneg %p141
      $region22: #{tpu_custom_call.1} parent=5 // pred_check_branch
        %144 = sbr.rel (%p142) target = $region24
      $region23: #{tpu_custom_call.1} parent=5 // pred_region
        // Predicated region
        $region25: #{tpu_custom_call.1} parent=23 // pred_check
          %p145 = pneg %p36
        $region26: #{tpu_custom_call.1} parent=23 // pred_check_branch
          %147 = sbr.rel (%p145) target = $region28
        $region27: #{tpu_custom_call.1} parent=23 // pred_region
          %s148 = sand.u32 %s26, 1
          %s149 = scalar_lea.sflag [#allocation3], %s148
          %s150 = sand.u32 %s26, 1
          %s151 = smul.addr %s150, 256
          %s152 = scalar_lea.vmem [#allocation2], %s151
          %s154 = ssub.s32 4096, 4096
          %155 = vsyncadd %s149, %s154
          %s156 = smul.addr %s16, 32
          %s157 = smul.addr %s156, 128
          %s158 = scalar_lea.hbm %s0, %s157
          %s159 = sshll.u32 %s152, 4
          %s160 = int_to_ptr.vmem [resolvable:$true] %s159
          %165 = dma.hbm_to_vmem [thread:$0]  %s158, 4096, %s160, %s149, 128, 128, 8
        $region28: #{tpu_custom_call.1} parent=23 // pred_fallthru
          _
      $region24: #{tpu_custom_call.1} parent=5 // pred_fallthru
        _
      %p166 = scmp.le.s32.totalorder 1, %s16
      %p167 = scmp.lt.s32.totalorder %s16, 3
      %p168 = pnand %p166, %p167
      %p169 = pneg %p168
      // Predicated region
      $region29: #{tpu_custom_call.1} parent=5 // pred_check
        _
      $region30: #{tpu_custom_call.1} parent=5 // pred_check_branch
        %171 = sbr.rel (%p168) target = $region32
      $region31: #{tpu_custom_call.1} parent=5 // pred_region
        %s172 = ssub.s32 %s16, 1
        %s173 = sand.u32 %s29, 1
        %s174 = scalar_lea.sflag [#allocation3], %s173
        %s175 = sand.u32 %s29, 1
        %s176 = smul.addr %s175, 256
        %s177 = scalar_lea.vmem [#allocation2], %s176
        // Predicated region
        $region33: #{tpu_custom_call.1} parent=31 // pred_check
          %p178 = pneg %p42
        $region34: #{tpu_custom_call.1} parent=31 // pred_check_branch
          %180 = sbr.rel (%p178) target = $region36
        $region35: #{tpu_custom_call.1} parent=31 // pred_region
          %181 = dma.done %s174, 4096
        $region36: #{tpu_custom_call.1} parent=31 // pred_fallthru
          _
        // Predicated region
        $region37: #{tpu_custom_call.1} parent=31 // pred_check
          %p182 = pneg %p63
        $region38: #{tpu_custom_call.1} parent=31 // pred_check_branch
          %184 = sbr.rel (%p182) target = $region40
        $region39: #{tpu_custom_call.1} parent=31 // pred_region
          %185 = dma.done [#allocation6], 256
        $region40: #{tpu_custom_call.1} parent=31 // pred_fallthru
          _
        %s186 = sand.u32 %s29, 1
        %s187 = scalar_lea.sflag [#allocation3], %s186
        %s188 = sand.u32 %s29, 1
        %s189 = smul.addr %s188, 256
        %s190 = scalar_lea.vmem [#allocation2], %s189
        %p191 = pneg %p42
        %p192 = pneg %p39
        %p193 = pneg %p63
        %p194 = pneg %p60
        %p195 = pneg %p84
        %p196 = pneg %p81
        %p197 = pneg %p110
        %p198 = pneg %p107
        %s199 = sand.u32 %s97, 1
        %s200 = scalar_lea.sflag [#allocation4], %s199
        %s201 = sand.u32 %s97, 1
        %s202 = smul.addr %s201, 256
        %s203 = scalar_lea.vmem [#allocation7], %s202
        %v204 = vld [vmem:[%s177] sm:$0xff]
        %v205 = vld [vmem:[%s177 + $0x8] sm:$0xff]
        %v206 = vld [vmem:[%s177 + $0x10] sm:$0xff]
        %v207 = vld [vmem:[%s177 + $0x18] sm:$0xff]
        %v208 = vld [vmem:[%s177 + $0x20] sm:$0xff]
        %v209 = vld [vmem:[%s177 + $0x28] sm:$0xff]
        %v210 = vld [vmem:[%s177 + $0x30] sm:$0xff]
        %v211 = vld [vmem:[%s177 + $0x38] sm:$0xff]
        %v212 = vld [vmem:[%s177 + $0x40] sm:$0xff]
        %v213 = vld [vmem:[%s177 + $0x48] sm:$0xff]
        %v214 = vld [vmem:[%s177 + $0x50] sm:$0xff]
        %v215 = vld [vmem:[%s177 + $0x58] sm:$0xff]
        %v216 = vld [vmem:[%s177 + $0x60] sm:$0xff]
        %v217 = vld [vmem:[%s177 + $0x68] sm:$0xff]
        %v218 = vld [vmem:[%s177 + $0x70] sm:$0xff]
        %v219 = vld [vmem:[%s177 + $0x78] sm:$0xff]
        %v220 = vld [vmem:[%s177 + $0x80] sm:$0xff]
        %v221 = vld [vmem:[%s177 + $0x88] sm:$0xff]
        %v222 = vld [vmem:[%s177 + $0x90] sm:$0xff]
        %v223 = vld [vmem:[%s177 + $0x98] sm:$0xff]
        %v224 = vld [vmem:[%s177 + $0xa0] sm:$0xff]
        %v225 = vld [vmem:[%s177 + $0xa8] sm:$0xff]
        %v226 = vld [vmem:[%s177 + $0xb0] sm:$0xff]
        %v227 = vld [vmem:[%s177 + $0xb8] sm:$0xff]
        %v228 = vld [vmem:[%s177 + $0xc0] sm:$0xff]
        %v229 = vld [vmem:[%s177 + $0xc8] sm:$0xff]
        %v230 = vld [vmem:[%s177 + $0xd0] sm:$0xff]
        %v231 = vld [vmem:[%s177 + $0xd8] sm:$0xff]
        %v232 = vld [vmem:[%s177 + $0xe0] sm:$0xff]
        %v233 = vld [vmem:[%s177 + $0xe8] sm:$0xff]
        %v234 = vld [vmem:[%s177 + $0xf0] sm:$0xff]
        %v235 = vld [vmem:[%s177 + $0xf8] sm:$0xff]
        %vm269 = vcmask 1040384
        %v270 = vrot.slane 0.0, 7
        %v271 = vsel %vm269, %v270, %v270
        %v272 = vrot.slane %v204, 7
        %v273 = vrot.slane %v205, 7
        %v274 = vsel %vm269, %v272, %v273
        %v275 = vrot.slane %v206, 7
        %v276 = vrot.slane %v207, 7
        %v277 = vsel %vm269, %v275, %v276
        %v278 = vrot.slane %v208, 7
        %v279 = vrot.slane %v209, 7
        %v280 = vsel %vm269, %v278, %v279
        %v281 = vrot.slane %v210, 7
        %v282 = vrot.slane %v211, 7
        %v283 = vsel %vm269, %v281, %v282
        %v284 = vrot.slane %v212, 7
        %v285 = vrot.slane %v213, 7
        %v286 = vsel %vm269, %v284, %v285
        %v287 = vrot.slane %v214, 7
        %v288 = vrot.slane %v215, 7
        %v289 = vsel %vm269, %v287, %v288
        %v290 = vrot.slane %v216, 7
        %v291 = vrot.slane %v217, 7
        %v292 = vsel %vm269, %v290, %v291
        %v293 = vrot.slane %v218, 7
        %v294 = vrot.slane %v219, 7
        %v295 = vsel %vm269, %v293, %v294
        %v296 = vrot.slane %v220, 7
        %v297 = vrot.slane %v221, 7
        %v298 = vsel %vm269, %v296, %v297
        %v299 = vrot.slane %v222, 7
        %v300 = vrot.slane %v223, 7
        %v301 = vsel %vm269, %v299, %v300
        %v302 = vrot.slane %v224, 7
        %v303 = vrot.slane %v225, 7
        %v304 = vsel %vm269, %v302, %v303
        %v305 = vrot.slane %v226, 7
        %v306 = vrot.slane %v227, 7
        %v307 = vsel %vm269, %v305, %v306
        %v308 = vrot.slane %v228, 7
        %v309 = vrot.slane %v229, 7
        %v310 = vsel %vm269, %v308, %v309
        %v311 = vrot.slane %v230, 7
        %v312 = vrot.slane %v231, 7
        %v313 = vsel %vm269, %v311, %v312
        %v314 = vrot.slane %v232, 7
        %v315 = vrot.slane %v233, 7
        %v316 = vsel %vm269, %v314, %v315
        %v317 = vrot.slane %v234, 7
        %v318 = vrot.slane %v235, 7
        %v319 = vsel %vm269, %v317, %v318
        %v370 = vsel %vm269, 0.0, %v270
        %v371 = vsel %vm269, 0.0, %v272
        %v372 = vsel %vm269, 0.0, %v275
        %v373 = vsel %vm269, 0.0, %v278
        %v374 = vsel %vm269, 0.0, %v281
        %v375 = vsel %vm269, 0.0, %v284
        %v376 = vsel %vm269, 0.0, %v287
        %v377 = vsel %vm269, 0.0, %v290
        %v378 = vsel %vm269, 0.0, %v293
        %v379 = vsel %vm269, 0.0, %v296
        %v380 = vsel %vm269, 0.0, %v299
        %v381 = vsel %vm269, 0.0, %v302
        %v382 = vsel %vm269, 0.0, %v305
        %v383 = vsel %vm269, 0.0, %v308
        %v384 = vsel %vm269, 0.0, %v311
        %v385 = vsel %vm269, 0.0, %v314
        %v386 = vsel %vm269, 0.0, %v317
        %v387 = vsel %vm269, %v270, 0.0
        %v388 = vsel %vm269, %v273, 0.0
        %v389 = vsel %vm269, %v276, 0.0
        %v390 = vsel %vm269, %v279, 0.0
        %v391 = vsel %vm269, %v282, 0.0
        %v392 = vsel %vm269, %v285, 0.0
        %v393 = vsel %vm269, %v288, 0.0
        %v394 = vsel %vm269, %v291, 0.0
        %v395 = vsel %vm269, %v294, 0.0
        %v396 = vsel %vm269, %v297, 0.0
        %v397 = vsel %vm269, %v300, 0.0
        %v398 = vsel %vm269, %v303, 0.0
        %v399 = vsel %vm269, %v306, 0.0
        %v400 = vsel %vm269, %v309, 0.0
        %v401 = vsel %vm269, %v312, 0.0
        %v402 = vsel %vm269, %v315, 0.0
        %v403 = vsel %vm269, %v318, 0.0
        %v404 = vld [vmem:[#allocation5] sm:$0xff]
        %v405 = vld [vmem:[#allocation5 + $0x8] sm:$0x1]
        %v406 = vlaneseq
        %v407 = vshrl.u32 %v406, 7
        %v408 = vsub.s32 0, %v407
        %v409 = vrot.slane %v404, %v408
        %v410 = vmul.f32 %v370, %v409
        %v411 = vmul.f32 %v271, %v409
        %v412 = vmul.f32 %v371, %v409
        %v413 = vmul.f32 %v274, %v409
        %v414 = vmul.f32 %v372, %v409
        %v415 = vmul.f32 %v277, %v409
        %v416 = vmul.f32 %v373, %v409
        %v417 = vmul.f32 %v280, %v409
        %v418 = vmul.f32 %v374, %v409
        %v419 = vmul.f32 %v283, %v409
        %v420 = vmul.f32 %v375, %v409
        %v421 = vmul.f32 %v286, %v409
        %v422 = vmul.f32 %v376, %v409
        %v423 = vmul.f32 %v289, %v409
        %v424 = vmul.f32 %v377, %v409
        %v425 = vmul.f32 %v292, %v409
        %v426 = vmul.f32 %v378, %v409
        %v427 = vmul.f32 %v295, %v409
        %v428 = vmul.f32 %v379, %v409
        %v429 = vmul.f32 %v298, %v409
        %v430 = vmul.f32 %v380, %v409
        %v431 = vmul.f32 %v301, %v409
        %v432 = vmul.f32 %v381, %v409
        %v433 = vmul.f32 %v304, %v409
        %v434 = vmul.f32 %v382, %v409
        %v435 = vmul.f32 %v307, %v409
        %v436 = vmul.f32 %v383, %v409
        %v437 = vmul.f32 %v310, %v409
        %v438 = vmul.f32 %v384, %v409
        %v439 = vmul.f32 %v313, %v409
        %v440 = vmul.f32 %v385, %v409
        %v441 = vmul.f32 %v316, %v409
        %v442 = vadd.f32 %v410, 0.0
        %v443 = vadd.f32 %v411, 0.0
        %v444 = vadd.f32 %v412, 0.0
        %v445 = vadd.f32 %v413, 0.0
        %v446 = vadd.f32 %v414, 0.0
        %v447 = vadd.f32 %v415, 0.0
        %v448 = vadd.f32 %v416, 0.0
        %v449 = vadd.f32 %v417, 0.0
        %v450 = vadd.f32 %v418, 0.0
        %v451 = vadd.f32 %v419, 0.0
        %v452 = vadd.f32 %v420, 0.0
        %v453 = vadd.f32 %v421, 0.0
        %v454 = vadd.f32 %v422, 0.0
        %v455 = vadd.f32 %v423, 0.0
        %v456 = vadd.f32 %v424, 0.0
        %v457 = vadd.f32 %v425, 0.0
        %v458 = vadd.f32 %v426, 0.0
        %v459 = vadd.f32 %v427, 0.0
        %v460 = vadd.f32 %v428, 0.0
        %v461 = vadd.f32 %v429, 0.0
        %v462 = vadd.f32 %v430, 0.0
        %v463 = vadd.f32 %v431, 0.0
        %v464 = vadd.f32 %v432, 0.0
        %v465 = vadd.f32 %v433, 0.0
        %v466 = vadd.f32 %v434, 0.0
        %v467 = vadd.f32 %v435, 0.0
        %v468 = vadd.f32 %v436, 0.0
        %v469 = vadd.f32 %v437, 0.0
        %v470 = vadd.f32 %v438, 0.0
        %v471 = vadd.f32 %v439, 0.0
        %v472 = vadd.f32 %v440, 0.0
        %v473 = vadd.f32 %v441, 0.0
        %v474 = vlaneseq
        %v475 = vshrl.u32 %v474, 7
        %v476 = vsub.s32 1, %v475
        %v477 = vrot.slane %v404, %v476
        %v478 = vmul.f32 %v370, %v477
        %v479 = vmul.f32 %v271, %v477
        %v480 = vmul.f32 %v387, %v477
        %v481 = vmul.f32 %v371, %v477
        %v482 = vmul.f32 %v274, %v477
        %v483 = vmul.f32 %v388, %v477
        %v484 = vmul.f32 %v372, %v477
        %v485 = vmul.f32 %v277, %v477
        %v486 = vmul.f32 %v389, %v477
        %v487 = vmul.f32 %v373, %v477
        %v488 = vmul.f32 %v280, %v477
        %v489 = vmul.f32 %v390, %v477
        %v490 = vmul.f32 %v374, %v477
        %v491 = vmul.f32 %v283, %v477
        %v492 = vmul.f32 %v391, %v477
        %v493 = vmul.f32 %v375, %v477
        %v494 = vmul.f32 %v286, %v477
        %v495 = vmul.f32 %v392, %v477
        %v496 = vmul.f32 %v376, %v477
        %v497 = vmul.f32 %v289, %v477
        %v498 = vmul.f32 %v393, %v477
        %v499 = vmul.f32 %v377, %v477
        %v500 = vmul.f32 %v292, %v477
        %v501 = vmul.f32 %v394, %v477
        %v502 = vmul.f32 %v378, %v477
        %v503 = vmul.f32 %v295, %v477
        %v504 = vmul.f32 %v395, %v477
        %v505 = vmul.f32 %v379, %v477
        %v506 = vmul.f32 %v298, %v477
        %v507 = vmul.f32 %v396, %v477
        %v508 = vmul.f32 %v380, %v477
        %v509 = vmul.f32 %v301, %v477
        %v510 = vmul.f32 %v397, %v477
        %v511 = vmul.f32 %v381, %v477
        %v512 = vmul.f32 %v304, %v477
        %v513 = vmul.f32 %v398, %v477
        %v514 = vmul.f32 %v382, %v477
        %v515 = vmul.f32 %v307, %v477
        %v516 = vmul.f32 %v399, %v477
        %v517 = vmul.f32 %v383, %v477
        %v518 = vmul.f32 %v310, %v477
        %v519 = vmul.f32 %v400, %v477
        %v520 = vmul.f32 %v384, %v477
        %v521 = vmul.f32 %v313, %v477
        %v522 = vmul.f32 %v401, %v477
        %v523 = vmul.f32 %v385, %v477
        %v524 = vmul.f32 %v316, %v477
        %v525 = vmul.f32 %v402, %v477
        %vm574 = vcmask 1046528
        %v575 = vrot.slane %v478, 1
        %v576 = vrot.slane %v479, 1
        %v577 = vsel %vm574, %v575, %v576
        %v578 = vrot.slane %v480, 1
        %v579 = vsel %vm574, %v576, %v578
        %v580 = vrot.slane %v481, 1
        %v581 = vrot.slane %v482, 1
        %v582 = vsel %vm574, %v580, %v581
        %v583 = vrot.slane %v483, 1
        %v584 = vsel %vm574, %v581, %v583
        %v585 = vrot.slane %v484, 1
        %v586 = vrot.slane %v485, 1
        %v587 = vsel %vm574, %v585, %v586
        %v588 = vrot.slane %v486, 1
        %v589 = vsel %vm574, %v586, %v588
        %v590 = vrot.slane %v487, 1
        %v591 = vrot.slane %v488, 1
        %v592 = vsel %vm574, %v590, %v591
        %v593 = vrot.slane %v489, 1
        %v594 = vsel %vm574, %v591, %v593
        %v595 = vrot.slane %v490, 1
        %v596 = vrot.slane %v491, 1
        %v597 = vsel %vm574, %v595, %v596
        %v598 = vrot.slane %v492, 1
        %v599 = vsel %vm574, %v596, %v598
        %v600 = vrot.slane %v493, 1
        %v601 = vrot.slane %v494, 1
        %v602 = vsel %vm574, %v600, %v601
        %v603 = vrot.slane %v495, 1
        %v604 = vsel %vm574, %v601, %v603
        %v605 = vrot.slane %v496, 1
        %v606 = vrot.slane %v497, 1
        %v607 = vsel %vm574, %v605, %v606
        %v608 = vrot.slane %v498, 1
        %v609 = vsel %vm574, %v606, %v608
        %v610 = vrot.slane %v499, 1
        %v611 = vrot.slane %v500, 1
        %v612 = vsel %vm574, %v610, %v611
        %v613 = vrot.slane %v501, 1
        %v614 = vsel %vm574, %v611, %v613
        %v615 = vrot.slane %v502, 1
        %v616 = vrot.slane %v503, 1
        %v617 = vsel %vm574, %v615, %v616
        %v618 = vrot.slane %v504, 1
        %v619 = vsel %vm574, %v616, %v618
        %v620 = vrot.slane %v505, 1
        %v621 = vrot.slane %v506, 1
        %v622 = vsel %vm574, %v620, %v621
        %v623 = vrot.slane %v507, 1
        %v624 = vsel %vm574, %v621, %v623
        %v625 = vrot.slane %v508, 1
        %v626 = vrot.slane %v509, 1
        %v627 = vsel %vm574, %v625, %v626
        %v628 = vrot.slane %v510, 1
        %v629 = vsel %vm574, %v626, %v628
        %v630 = vrot.slane %v511, 1
        %v631 = vrot.slane %v512, 1
        %v632 = vsel %vm574, %v630, %v631
        %v633 = vrot.slane %v513, 1
        %v634 = vsel %vm574, %v631, %v633
        %v635 = vrot.slane %v514, 1
        %v636 = vrot.slane %v515, 1
        %v637 = vsel %vm574, %v635, %v636
        %v638 = vrot.slane %v516, 1
        %v639 = vsel %vm574, %v636, %v638
        %v640 = vrot.slane %v517, 1
        %v641 = vrot.slane %v518, 1
        %v642 = vsel %vm574, %v640, %v641
        %v643 = vrot.slane %v519, 1
        %v644 = vsel %vm574, %v641, %v643
        %v645 = vrot.slane %v520, 1
        %v646 = vrot.slane %v521, 1
        %v647 = vsel %vm574, %v645, %v646
        %v648 = vrot.slane %v522, 1
        %v649 = vsel %vm574, %v646, %v648
        %v650 = vrot.slane %v523, 1
        %v651 = vrot.slane %v524, 1
        %v652 = vsel %vm574, %v650, %v651
        %v653 = vrot.slane %v525, 1
        %v654 = vsel %vm574, %v651, %v653
        %v687 = vadd.f32 %v442, %v577
        %v688 = vadd.f32 %v443, %v579
        %v689 = vadd.f32 %v444, %v582
        %v690 = vadd.f32 %v445, %v584
        %v691 = vadd.f32 %v446, %v587
        %v692 = vadd.f32 %v447, %v589
        %v693 = vadd.f32 %v448, %v592
        %v694 = vadd.f32 %v449, %v594
        %v695 = vadd.f32 %v450, %v597
        %v696 = vadd.f32 %v451, %v599
        %v697 = vadd.f32 %v452, %v602
        %v698 = vadd.f32 %v453, %v604
        %v699 = vadd.f32 %v454, %v607
        %v700 = vadd.f32 %v455, %v609
        %v701 = vadd.f32 %v456, %v612
        %v702 = vadd.f32 %v457, %v614
        %v703 = vadd.f32 %v458, %v617
        %v704 = vadd.f32 %v459, %v619
        %v705 = vadd.f32 %v460, %v622
        %v706 = vadd.f32 %v461, %v624
        %v707 = vadd.f32 %v462, %v627
        %v708 = vadd.f32 %v463, %v629
        %v709 = vadd.f32 %v464, %v632
        %v710 = vadd.f32 %v465, %v634
        %v711 = vadd.f32 %v466, %v637
        %v712 = vadd.f32 %v467, %v639
        %v713 = vadd.f32 %v468, %v642
        %v714 = vadd.f32 %v469, %v644
        %v715 = vadd.f32 %v470, %v647
        %v716 = vadd.f32 %v471, %v649
        %v717 = vadd.f32 %v472, %v652
        %v718 = vadd.f32 %v473, %v654
        %v719 = vlaneseq
        %v720 = vshrl.u32 %v719, 7
        %v721 = vsub.s32 2, %v720
        %v722 = vrot.slane %v404, %v721
        %v723 = vmul.f32 %v370, %v722
        %v724 = vmul.f32 %v271, %v722
        %v725 = vmul.f32 %v387, %v722
        %v726 = vmul.f32 %v371, %v722
        %v727 = vmul.f32 %v274, %v722
        %v728 = vmul.f32 %v388, %v722
        %v729 = vmul.f32 %v372, %v722
        %v730 = vmul.f32 %v277, %v722
        %v731 = vmul.f32 %v389, %v722
        %v732 = vmul.f32 %v373, %v722
        %v733 = vmul.f32 %v280, %v722
        %v734 = vmul.f32 %v390, %v722
        %v735 = vmul.f32 %v374, %v722
        %v736 = vmul.f32 %v283, %v722
        %v737 = vmul.f32 %v391, %v722
        %v738 = vmul.f32 %v375, %v722
        %v739 = vmul.f32 %v286, %v722
        %v740 = vmul.f32 %v392, %v722
        %v741 = vmul.f32 %v376, %v722
        %v742 = vmul.f32 %v289, %v722
        %v743 = vmul.f32 %v393, %v722
        %v744 = vmul.f32 %v377, %v722
        %v745 = vmul.f32 %v292, %v722
        %v746 = vmul.f32 %v394, %v722
        %v747 = vmul.f32 %v378, %v722
        %v748 = vmul.f32 %v295, %v722
        %v749 = vmul.f32 %v395, %v722
        %v750 = vmul.f32 %v379, %v722
        %v751 = vmul.f32 %v298, %v722
        %v752 = vmul.f32 %v396, %v722
        %v753 = vmul.f32 %v380, %v722
        %v754 = vmul.f32 %v301, %v722
        %v755 = vmul.f32 %v397, %v722
        %v756 = vmul.f32 %v381, %v722
        %v757 = vmul.f32 %v304, %v722
        %v758 = vmul.f32 %v398, %v722
        %v759 = vmul.f32 %v382, %v722
        %v760 = vmul.f32 %v307, %v722
        %v761 = vmul.f32 %v399, %v722
        %v762 = vmul.f32 %v383, %v722
        %v763 = vmul.f32 %v310, %v722
        %v764 = vmul.f32 %v400, %v722
        %v765 = vmul.f32 %v384, %v722
        %v766 = vmul.f32 %v313, %v722
        %v767 = vmul.f32 %v401, %v722
        %v768 = vmul.f32 %v385, %v722
        %v769 = vmul.f32 %v316, %v722
        %v770 = vmul.f32 %v402, %v722
        %vm819 = vcmask 1045504
        %v820 = vrot.slane %v723, 2
        %v821 = vrot.slane %v724, 2
        %v822 = vsel %vm819, %v820, %v821
        %v823 = vrot.slane %v725, 2
        %v824 = vsel %vm819, %v821, %v823
        %v825 = vrot.slane %v726, 2
        %v826 = vrot.slane %v727, 2
        %v827 = vsel %vm819, %v825, %v826
        %v828 = vrot.slane %v728, 2
        %v829 = vsel %vm819, %v826, %v828
        %v830 = vrot.slane %v729, 2
        %v831 = vrot.slane %v730, 2
        %v832 = vsel %vm819, %v830, %v831
        %v833 = vrot.slane %v731, 2
        %v834 = vsel %vm819, %v831, %v833
        %v835 = vrot.slane %v732, 2
        %v836 = vrot.slane %v733, 2
        %v837 = vsel %vm819, %v835, %v836
        %v838 = vrot.slane %v734, 2
        %v839 = vsel %vm819, %v836, %v838
        %v840 = vrot.slane %v735, 2
        %v841 = vrot.slane %v736, 2
        %v842 = vsel %vm819, %v840, %v841
        %v843 = vrot.slane %v737, 2
        %v844 = vsel %vm819, %v841, %v843
        %v845 = vrot.slane %v738, 2
        %v846 = vrot.slane %v739, 2
        %v847 = vsel %vm819, %v845, %v846
        %v848 = vrot.slane %v740, 2
        %v849 = vsel %vm819, %v846, %v848
        %v850 = vrot.slane %v741, 2
        %v851 = vrot.slane %v742, 2
        %v852 = vsel %vm819, %v850, %v851
        %v853 = vrot.slane %v743, 2
        %v854 = vsel %vm819, %v851, %v853
        %v855 = vrot.slane %v744, 2
        %v856 = vrot.slane %v745, 2
        %v857 = vsel %vm819, %v855, %v856
        %v858 = vrot.slane %v746, 2
        %v859 = vsel %vm819, %v856, %v858
        %v860 = vrot.slane %v747, 2
        %v861 = vrot.slane %v748, 2
        %v862 = vsel %vm819, %v860, %v861
        %v863 = vrot.slane %v749, 2
        %v864 = vsel %vm819, %v861, %v863
        %v865 = vrot.slane %v750, 2
        %v866 = vrot.slane %v751, 2
        %v867 = vsel %vm819, %v865, %v866
        %v868 = vrot.slane %v752, 2
        %v869 = vsel %vm819, %v866, %v868
        %v870 = vrot.slane %v753, 2
        %v871 = vrot.slane %v754, 2
        %v872 = vsel %vm819, %v870, %v871
        %v873 = vrot.slane %v755, 2
        %v874 = vsel %vm819, %v871, %v873
        %v875 = vrot.slane %v756, 2
        %v876 = vrot.slane %v757, 2
        %v877 = vsel %vm819, %v875, %v876
        %v878 = vrot.slane %v758, 2
        %v879 = vsel %vm819, %v876, %v878
        %v880 = vrot.slane %v759, 2
        %v881 = vrot.slane %v760, 2
        %v882 = vsel %vm819, %v880, %v881
        %v883 = vrot.slane %v761, 2
        %v884 = vsel %vm819, %v881, %v883
        %v885 = vrot.slane %v762, 2
        %v886 = vrot.slane %v763, 2
        %v887 = vsel %vm819, %v885, %v886
        %v888 = vrot.slane %v764, 2
        %v889 = vsel %vm819, %v886, %v888
        %v890 = vrot.slane %v765, 2
        %v891 = vrot.slane %v766, 2
        %v892 = vsel %vm819, %v890, %v891
        %v893 = vrot.slane %v767, 2
        %v894 = vsel %vm819, %v891, %v893
        %v895 = vrot.slane %v768, 2
        %v896 = vrot.slane %v769, 2
        %v897 = vsel %vm819, %v895, %v896
        %v898 = vrot.slane %v770, 2
        %v899 = vsel %vm819, %v896, %v898
        %v932 = vadd.f32 %v687, %v822
        %v933 = vadd.f32 %v688, %v824
        %v934 = vadd.f32 %v689, %v827
        %v935 = vadd.f32 %v690, %v829
        %v936 = vadd.f32 %v691, %v832
        %v937 = vadd.f32 %v692, %v834
        %v938 = vadd.f32 %v693, %v837
        %v939 = vadd.f32 %v694, %v839
        %v940 = vadd.f32 %v695, %v842
        %v941 = vadd.f32 %v696, %v844
        %v942 = vadd.f32 %v697, %v847
        %v943 = vadd.f32 %v698, %v849
        %v944 = vadd.f32 %v699, %v852
        %v945 = vadd.f32 %v700, %v854
        %v946 = vadd.f32 %v701, %v857
        %v947 = vadd.f32 %v702, %v859
        %v948 = vadd.f32 %v703, %v862
        %v949 = vadd.f32 %v704, %v864
        %v950 = vadd.f32 %v705, %v867
        %v951 = vadd.f32 %v706, %v869
        %v952 = vadd.f32 %v707, %v872
        %v953 = vadd.f32 %v708, %v874
        %v954 = vadd.f32 %v709, %v877
        %v955 = vadd.f32 %v710, %v879
        %v956 = vadd.f32 %v711, %v882
        %v957 = vadd.f32 %v712, %v884
        %v958 = vadd.f32 %v713, %v887
        %v959 = vadd.f32 %v714, %v889
        %v960 = vadd.f32 %v715, %v892
        %v961 = vadd.f32 %v716, %v894
        %v962 = vadd.f32 %v717, %v897
        %v963 = vadd.f32 %v718, %v899
        %v964 = vlaneseq
        %v965 = vshrl.u32 %v964, 7
        %v966 = vsub.s32 3, %v965
        %v967 = vrot.slane %v404, %v966
        %v968 = vmul.f32 %v371, %v967
        %v969 = vmul.f32 %v274, %v967
        %v970 = vmul.f32 %v372, %v967
        %v971 = vmul.f32 %v277, %v967
        %v972 = vmul.f32 %v373, %v967
        %v973 = vmul.f32 %v280, %v967
        %v974 = vmul.f32 %v374, %v967
        %v975 = vmul.f32 %v283, %v967
        %v976 = vmul.f32 %v375, %v967
        %v977 = vmul.f32 %v286, %v967
        %v978 = vmul.f32 %v376, %v967
        %v979 = vmul.f32 %v289, %v967
        %v980 = vmul.f32 %v377, %v967
        %v981 = vmul.f32 %v292, %v967
        %v982 = vmul.f32 %v378, %v967
        %v983 = vmul.f32 %v295, %v967
        %v984 = vmul.f32 %v379, %v967
        %v985 = vmul.f32 %v298, %v967
        %v986 = vmul.f32 %v380, %v967
        %v987 = vmul.f32 %v301, %v967
        %v988 = vmul.f32 %v381, %v967
        %v989 = vmul.f32 %v304, %v967
        %v990 = vmul.f32 %v382, %v967
        %v991 = vmul.f32 %v307, %v967
        %v992 = vmul.f32 %v383, %v967
        %v993 = vmul.f32 %v310, %v967
        %v994 = vmul.f32 %v384, %v967
        %v995 = vmul.f32 %v313, %v967
        %v996 = vmul.f32 %v385, %v967
        %v997 = vmul.f32 %v316, %v967
        %v998 = vmul.f32 %v386, %v967
        %v999 = vmul.f32 %v319, %v967
        %v1000 = vadd.f32 %v932, %v968
        %v1001 = vadd.f32 %v933, %v969
        %v1002 = vadd.f32 %v934, %v970
        %v1003 = vadd.f32 %v935, %v971
        %v1004 = vadd.f32 %v936, %v972
        %v1005 = vadd.f32 %v937, %v973
        %v1006 = vadd.f32 %v938, %v974
        %v1007 = vadd.f32 %v939, %v975
        %v1008 = vadd.f32 %v940, %v976
        %v1009 = vadd.f32 %v941, %v977
        %v1010 = vadd.f32 %v942, %v978
        %v1011 = vadd.f32 %v943, %v979
        %v1012 = vadd.f32 %v944, %v980
        %v1013 = vadd.f32 %v945, %v981
        %v1014 = vadd.f32 %v946, %v982
        %v1015 = vadd.f32 %v947, %v983
        %v1016 = vadd.f32 %v948, %v984
        %v1017 = vadd.f32 %v949, %v985
        %v1018 = vadd.f32 %v950, %v986
        %v1019 = vadd.f32 %v951, %v987
        %v1020 = vadd.f32 %v952, %v988
        %v1021 = vadd.f32 %v953, %v989
        %v1022 = vadd.f32 %v954, %v990
        %v1023 = vadd.f32 %v955, %v991
        %v1024 = vadd.f32 %v956, %v992
        %v1025 = vadd.f32 %v957, %v993
        %v1026 = vadd.f32 %v958, %v994
        %v1027 = vadd.f32 %v959, %v995
        %v1028 = vadd.f32 %v960, %v996
        %v1029 = vadd.f32 %v961, %v997
        %v1030 = vadd.f32 %v962, %v998
        %v1031 = vadd.f32 %v963, %v999
        %v1032 = vlaneseq
        %v1033 = vshrl.u32 %v1032, 7
        %v1034 = vsub.s32 4, %v1033
        %v1035 = vrot.slane %v404, %v1034
        %v1036 = vmul.f32 %v371, %v1035
        %v1037 = vmul.f32 %v274, %v1035
        %v1038 = vmul.f32 %v388, %v1035
        %v1039 = vmul.f32 %v372, %v1035
        %v1040 = vmul.f32 %v277, %v1035
        %v1041 = vmul.f32 %v389, %v1035
        %v1042 = vmul.f32 %v373, %v1035
        %v1043 = vmul.f32 %v280, %v1035
        %v1044 = vmul.f32 %v390, %v1035
        %v1045 = vmul.f32 %v374, %v1035
        %v1046 = vmul.f32 %v283, %v1035
        %v1047 = vmul.f32 %v391, %v1035
        %v1048 = vmul.f32 %v375, %v1035
        %v1049 = vmul.f32 %v286, %v1035
        %v1050 = vmul.f32 %v392, %v1035
        %v1051 = vmul.f32 %v376, %v1035
        %v1052 = vmul.f32 %v289, %v1035
        %v1053 = vmul.f32 %v393, %v1035
        %v1054 = vmul.f32 %v377, %v1035
        %v1055 = vmul.f32 %v292, %v1035
        %v1056 = vmul.f32 %v394, %v1035
        %v1057 = vmul.f32 %v378, %v1035
        %v1058 = vmul.f32 %v295, %v1035
        %v1059 = vmul.f32 %v395, %v1035
        %v1060 = vmul.f32 %v379, %v1035
        %v1061 = vmul.f32 %v298, %v1035
        %v1062 = vmul.f32 %v396, %v1035
        %v1063 = vmul.f32 %v380, %v1035
        %v1064 = vmul.f32 %v301, %v1035
        %v1065 = vmul.f32 %v397, %v1035
        %v1066 = vmul.f32 %v381, %v1035
        %v1067 = vmul.f32 %v304, %v1035
        %v1068 = vmul.f32 %v398, %v1035
        %v1069 = vmul.f32 %v382, %v1035
        %v1070 = vmul.f32 %v307, %v1035
        %v1071 = vmul.f32 %v399, %v1035
        %v1072 = vmul.f32 %v383, %v1035
        %v1073 = vmul.f32 %v310, %v1035
        %v1074 = vmul.f32 %v400, %v1035
        %v1075 = vmul.f32 %v384, %v1035
        %v1076 = vmul.f32 %v313, %v1035
        %v1077 = vmul.f32 %v401, %v1035
        %v1078 = vmul.f32 %v385, %v1035
        %v1079 = vmul.f32 %v316, %v1035
        %v1080 = vmul.f32 %v402, %v1035
        %v1081 = vmul.f32 %v386, %v1035
        %v1082 = vmul.f32 %v319, %v1035
        %v1083 = vmul.f32 %v403, %v1035
        %v1132 = vrot.slane %v1036, 1
        %v1133 = vrot.slane %v1037, 1
        %v1134 = vsel %vm574, %v1132, %v1133
        %v1135 = vrot.slane %v1038, 1
        %v1136 = vsel %vm574, %v1133, %v1135
        %v1137 = vrot.slane %v1039, 1
        %v1138 = vrot.slane %v1040, 1
        %v1139 = vsel %vm574, %v1137, %v1138
        %v1140 = vrot.slane %v1041, 1
        %v1141 = vsel %vm574, %v1138, %v1140
        %v1142 = vrot.slane %v1042, 1
        %v1143 = vrot.slane %v1043, 1
        %v1144 = vsel %vm574, %v1142, %v1143
        %v1145 = vrot.slane %v1044, 1
        %v1146 = vsel %vm574, %v1143, %v1145
        %v1147 = vrot.slane %v1045, 1
        %v1148 = vrot.slane %v1046, 1
        %v1149 = vsel %vm574, %v1147, %v1148
        %v1150 = vrot.slane %v1047, 1
        %v1151 = vsel %vm574, %v1148, %v1150
        %v1152 = vrot.slane %v1048, 1
        %v1153 = vrot.slane %v1049, 1
        %v1154 = vsel %vm574, %v1152, %v1153
        %v1155 = vrot.slane %v1050, 1
        %v1156 = vsel %vm574, %v1153, %v1155
        %v1157 = vrot.slane %v1051, 1
        %v1158 = vrot.slane %v1052, 1
        %v1159 = vsel %vm574, %v1157, %v1158
        %v1160 = vrot.slane %v1053, 1
        %v1161 = vsel %vm574, %v1158, %v1160
        %v1162 = vrot.slane %v1054, 1
        %v1163 = vrot.slane %v1055, 1
        %v1164 = vsel %vm574, %v1162, %v1163
        %v1165 = vrot.slane %v1056, 1
        %v1166 = vsel %vm574, %v1163, %v1165
        %v1167 = vrot.slane %v1057, 1
        %v1168 = vrot.slane %v1058, 1
        %v1169 = vsel %vm574, %v1167, %v1168
        %v1170 = vrot.slane %v1059, 1
        %v1171 = vsel %vm574, %v1168, %v1170
        %v1172 = vrot.slane %v1060, 1
        %v1173 = vrot.slane %v1061, 1
        %v1174 = vsel %vm574, %v1172, %v1173
        %v1175 = vrot.slane %v1062, 1
        %v1176 = vsel %vm574, %v1173, %v1175
        %v1177 = vrot.slane %v1063, 1
        %v1178 = vrot.slane %v1064, 1
        %v1179 = vsel %vm574, %v1177, %v1178
        %v1180 = vrot.slane %v1065, 1
        %v1181 = vsel %vm574, %v1178, %v1180
        %v1182 = vrot.slane %v1066, 1
        %v1183 = vrot.slane %v1067, 1
        %v1184 = vsel %vm574, %v1182, %v1183
        %v1185 = vrot.slane %v1068, 1
        %v1186 = vsel %vm574, %v1183, %v1185
        %v1187 = vrot.slane %v1069, 1
        %v1188 = vrot.slane %v1070, 1
        %v1189 = vsel %vm574, %v1187, %v1188
        %v1190 = vrot.slane %v1071, 1
        %v1191 = vsel %vm574, %v1188, %v1190
        %v1192 = vrot.slane %v1072, 1
        %v1193 = vrot.slane %v1073, 1
        %v1194 = vsel %vm574, %v1192, %v1193
        %v1195 = vrot.slane %v1074, 1
        %v1196 = vsel %vm574, %v1193, %v1195
        %v1197 = vrot.slane %v1075, 1
        %v1198 = vrot.slane %v1076, 1
        %v1199 = vsel %vm574, %v1197, %v1198
        %v1200 = vrot.slane %v1077, 1
        %v1201 = vsel %vm574, %v1198, %v1200
        %v1202 = vrot.slane %v1078, 1
        %v1203 = vrot.slane %v1079, 1
        %v1204 = vsel %vm574, %v1202, %v1203
        %v1205 = vrot.slane %v1080, 1
        %v1206 = vsel %vm574, %v1203, %v1205
        %v1207 = vrot.slane %v1081, 1
        %v1208 = vrot.slane %v1082, 1
        %v1209 = vsel %vm574, %v1207, %v1208
        %v1210 = vrot.slane %v1083, 1
        %v1211 = vsel %vm574, %v1208, %v1210
        %v1244 = vadd.f32 %v1000, %v1134
        %v1245 = vadd.f32 %v1001, %v1136
        %v1246 = vadd.f32 %v1002, %v1139
        %v1247 = vadd.f32 %v1003, %v1141
        %v1248 = vadd.f32 %v1004, %v1144
        %v1249 = vadd.f32 %v1005, %v1146
        %v1250 = vadd.f32 %v1006, %v1149
        %v1251 = vadd.f32 %v1007, %v1151
        %v1252 = vadd.f32 %v1008, %v1154
        %v1253 = vadd.f32 %v1009, %v1156
        %v1254 = vadd.f32 %v1010, %v1159
        %v1255 = vadd.f32 %v1011, %v1161
        %v1256 = vadd.f32 %v1012, %v1164
        %v1257 = vadd.f32 %v1013, %v1166
        %v1258 = vadd.f32 %v1014, %v1169
        %v1259 = vadd.f32 %v1015, %v1171
        %v1260 = vadd.f32 %v1016, %v1174
        %v1261 = vadd.f32 %v1017, %v1176
        %v1262 = vadd.f32 %v1018, %v1179
        %v1263 = vadd.f32 %v1019, %v1181
        %v1264 = vadd.f32 %v1020, %v1184
        %v1265 = vadd.f32 %v1021, %v1186
        %v1266 = vadd.f32 %v1022, %v1189
        %v1267 = vadd.f32 %v1023, %v1191
        %v1268 = vadd.f32 %v1024, %v1194
        %v1269 = vadd.f32 %v1025, %v1196
        %v1270 = vadd.f32 %v1026, %v1199
        %v1271 = vadd.f32 %v1027, %v1201
        %v1272 = vadd.f32 %v1028, %v1204
        %v1273 = vadd.f32 %v1029, %v1206
        %v1274 = vadd.f32 %v1030, %v1209
        %v1275 = vadd.f32 %v1031, %v1211
        %v1276 = vlaneseq
        %v1277 = vshrl.u32 %v1276, 7
        %v1278 = vsub.s32 5, %v1277
        %v1279 = vrot.slane %v404, %v1278
        %v1280 = vmul.f32 %v371, %v1279
        %v1281 = vmul.f32 %v274, %v1279
        %v1282 = vmul.f32 %v388, %v1279
        %v1283 = vmul.f32 %v372, %v1279
        %v1284 = vmul.f32 %v277, %v1279
        %v1285 = vmul.f32 %v389, %v1279
        %v1286 = vmul.f32 %v373, %v1279
        %v1287 = vmul.f32 %v280, %v1279
        %v1288 = vmul.f32 %v390, %v1279
        %v1289 = vmul.f32 %v374, %v1279
        %v1290 = vmul.f32 %v283, %v1279
        %v1291 = vmul.f32 %v391, %v1279
        %v1292 = vmul.f32 %v375, %v1279
        %v1293 = vmul.f32 %v286, %v1279
        %v1294 = vmul.f32 %v392, %v1279
        %v1295 = vmul.f32 %v376, %v1279
        %v1296 = vmul.f32 %v289, %v1279
        %v1297 = vmul.f32 %v393, %v1279
        %v1298 = vmul.f32 %v377, %v1279
        %v1299 = vmul.f32 %v292, %v1279
        %v1300 = vmul.f32 %v394, %v1279
        %v1301 = vmul.f32 %v378, %v1279
        %v1302 = vmul.f32 %v295, %v1279
        %v1303 = vmul.f32 %v395, %v1279
        %v1304 = vmul.f32 %v379, %v1279
        %v1305 = vmul.f32 %v298, %v1279
        %v1306 = vmul.f32 %v396, %v1279
        %v1307 = vmul.f32 %v380, %v1279
        %v1308 = vmul.f32 %v301, %v1279
        %v1309 = vmul.f32 %v397, %v1279
        %v1310 = vmul.f32 %v381, %v1279
        %v1311 = vmul.f32 %v304, %v1279
        %v1312 = vmul.f32 %v398, %v1279
        %v1313 = vmul.f32 %v382, %v1279
        %v1314 = vmul.f32 %v307, %v1279
        %v1315 = vmul.f32 %v399, %v1279
        %v1316 = vmul.f32 %v383, %v1279
        %v1317 = vmul.f32 %v310, %v1279
        %v1318 = vmul.f32 %v400, %v1279
        %v1319 = vmul.f32 %v384, %v1279
        %v1320 = vmul.f32 %v313, %v1279
        %v1321 = vmul.f32 %v401, %v1279
        %v1322 = vmul.f32 %v385, %v1279
        %v1323 = vmul.f32 %v316, %v1279
        %v1324 = vmul.f32 %v402, %v1279
        %v1325 = vmul.f32 %v386, %v1279
        %v1326 = vmul.f32 %v319, %v1279
        %v1327 = vmul.f32 %v403, %v1279
        %v1376 = vrot.slane %v1280, 2
        %v1377 = vrot.slane %v1281, 2
        %v1378 = vsel %vm819, %v1376, %v1377
        %v1379 = vrot.slane %v1282, 2
        %v1380 = vsel %vm819, %v1377, %v1379
        %v1381 = vrot.slane %v1283, 2
        %v1382 = vrot.slane %v1284, 2
        %v1383 = vsel %vm819, %v1381, %v1382
        %v1384 = vrot.slane %v1285, 2
        %v1385 = vsel %vm819, %v1382, %v1384
        %v1386 = vrot.slane %v1286, 2
        %v1387 = vrot.slane %v1287, 2
        %v1388 = vsel %vm819, %v1386, %v1387
        %v1389 = vrot.slane %v1288, 2
        %v1390 = vsel %vm819, %v1387, %v1389
        %v1391 = vrot.slane %v1289, 2
        %v1392 = vrot.slane %v1290, 2
        %v1393 = vsel %vm819, %v1391, %v1392
        %v1394 = vrot.slane %v1291, 2
        %v1395 = vsel %vm819, %v1392, %v1394
        %v1396 = vrot.slane %v1292, 2
        %v1397 = vrot.slane %v1293, 2
        %v1398 = vsel %vm819, %v1396, %v1397
        %v1399 = vrot.slane %v1294, 2
        %v1400 = vsel %vm819, %v1397, %v1399
        %v1401 = vrot.slane %v1295, 2
        %v1402 = vrot.slane %v1296, 2
        %v1403 = vsel %vm819, %v1401, %v1402
        %v1404 = vrot.slane %v1297, 2
        %v1405 = vsel %vm819, %v1402, %v1404
        %v1406 = vrot.slane %v1298, 2
        %v1407 = vrot.slane %v1299, 2
        %v1408 = vsel %vm819, %v1406, %v1407
        %v1409 = vrot.slane %v1300, 2
        %v1410 = vsel %vm819, %v1407, %v1409
        %v1411 = vrot.slane %v1301, 2
        %v1412 = vrot.slane %v1302, 2
        %v1413 = vsel %vm819, %v1411, %v1412
        %v1414 = vrot.slane %v1303, 2
        %v1415 = vsel %vm819, %v1412, %v1414
        %v1416 = vrot.slane %v1304, 2
        %v1417 = vrot.slane %v1305, 2
        %v1418 = vsel %vm819, %v1416, %v1417
        %v1419 = vrot.slane %v1306, 2
        %v1420 = vsel %vm819, %v1417, %v1419
        %v1421 = vrot.slane %v1307, 2
        %v1422 = vrot.slane %v1308, 2
        %v1423 = vsel %vm819, %v1421, %v1422
        %v1424 = vrot.slane %v1309, 2
        %v1425 = vsel %vm819, %v1422, %v1424
        %v1426 = vrot.slane %v1310, 2
        %v1427 = vrot.slane %v1311, 2
        %v1428 = vsel %vm819, %v1426, %v1427
        %v1429 = vrot.slane %v1312, 2
        %v1430 = vsel %vm819, %v1427, %v1429
        %v1431 = vrot.slane %v1313, 2
        %v1432 = vrot.slane %v1314, 2
        %v1433 = vsel %vm819, %v1431, %v1432
        %v1434 = vrot.slane %v1315, 2
        %v1435 = vsel %vm819, %v1432, %v1434
        %v1436 = vrot.slane %v1316, 2
        %v1437 = vrot.slane %v1317, 2
        %v1438 = vsel %vm819, %v1436, %v1437
        %v1439 = vrot.slane %v1318, 2
        %v1440 = vsel %vm819, %v1437, %v1439
        %v1441 = vrot.slane %v1319, 2
        %v1442 = vrot.slane %v1320, 2
        %v1443 = vsel %vm819, %v1441, %v1442
        %v1444 = vrot.slane %v1321, 2
        %v1445 = vsel %vm819, %v1442, %v1444
        %v1446 = vrot.slane %v1322, 2
        %v1447 = vrot.slane %v1323, 2
        %v1448 = vsel %vm819, %v1446, %v1447
        %v1449 = vrot.slane %v1324, 2
        %v1450 = vsel %vm819, %v1447, %v1449
        %v1451 = vrot.slane %v1325, 2
        %v1452 = vrot.slane %v1326, 2
        %v1453 = vsel %vm819, %v1451, %v1452
        %v1454 = vrot.slane %v1327, 2
        %v1455 = vsel %vm819, %v1452, %v1454
        %v1488 = vadd.f32 %v1244, %v1378
        %v1489 = vadd.f32 %v1245, %v1380
        %v1490 = vadd.f32 %v1246, %v1383
        %v1491 = vadd.f32 %v1247, %v1385
        %v1492 = vadd.f32 %v1248, %v1388
        %v1493 = vadd.f32 %v1249, %v1390
        %v1494 = vadd.f32 %v1250, %v1393
        %v1495 = vadd.f32 %v1251, %v1395
        %v1496 = vadd.f32 %v1252, %v1398
        %v1497 = vadd.f32 %v1253, %v1400
        %v1498 = vadd.f32 %v1254, %v1403
        %v1499 = vadd.f32 %v1255, %v1405
        %v1500 = vadd.f32 %v1256, %v1408
        %v1501 = vadd.f32 %v1257, %v1410
        %v1502 = vadd.f32 %v1258, %v1413
        %v1503 = vadd.f32 %v1259, %v1415
        %v1504 = vadd.f32 %v1260, %v1418
        %v1505 = vadd.f32 %v1261, %v1420
        %v1506 = vadd.f32 %v1262, %v1423
        %v1507 = vadd.f32 %v1263, %v1425
        %v1508 = vadd.f32 %v1264, %v1428
        %v1509 = vadd.f32 %v1265, %v1430
        %v1510 = vadd.f32 %v1266, %v1433
        %v1511 = vadd.f32 %v1267, %v1435
        %v1512 = vadd.f32 %v1268, %v1438
        %v1513 = vadd.f32 %v1269, %v1440
        %v1514 = vadd.f32 %v1270, %v1443
        %v1515 = vadd.f32 %v1271, %v1445
        %v1516 = vadd.f32 %v1272, %v1448
        %v1517 = vadd.f32 %v1273, %v1450
        %v1518 = vadd.f32 %v1274, %v1453
        %v1519 = vadd.f32 %v1275, %v1455
        %v1520 = vlaneseq
        %v1521 = vshrl.u32 %v1520, 7
        %v1522 = vsub.s32 6, %v1521
        %v1523 = vrot.slane %v404, %v1522
        %v1524 = vmul.f32 %v372, %v1523
        %v1525 = vmul.f32 %v277, %v1523
        %v1526 = vmul.f32 %v373, %v1523
        %v1527 = vmul.f32 %v280, %v1523
        %v1528 = vmul.f32 %v374, %v1523
        %v1529 = vmul.f32 %v283, %v1523
        %v1530 = vmul.f32 %v375, %v1523
        %v1531 = vmul.f32 %v286, %v1523
        %v1532 = vmul.f32 %v376, %v1523
        %v1533 = vmul.f32 %v289, %v1523
        %v1534 = vmul.f32 %v377, %v1523
        %v1535 = vmul.f32 %v292, %v1523
        %v1536 = vmul.f32 %v378, %v1523
        %v1537 = vmul.f32 %v295, %v1523
        %v1538 = vmul.f32 %v379, %v1523
        %v1539 = vmul.f32 %v298, %v1523
        %v1540 = vmul.f32 %v380, %v1523
        %v1541 = vmul.f32 %v301, %v1523
        %v1542 = vmul.f32 %v381, %v1523
        %v1543 = vmul.f32 %v304, %v1523
        %v1544 = vmul.f32 %v382, %v1523
        %v1545 = vmul.f32 %v307, %v1523
        %v1546 = vmul.f32 %v383, %v1523
        %v1547 = vmul.f32 %v310, %v1523
        %v1548 = vmul.f32 %v384, %v1523
        %v1549 = vmul.f32 %v313, %v1523
        %v1550 = vmul.f32 %v385, %v1523
        %v1551 = vmul.f32 %v316, %v1523
        %v1552 = vmul.f32 %v386, %v1523
        %v1553 = vmul.f32 %v319, %v1523
        %v1554 = vmul.f32 %v370, %v1523
        %v1555 = vmul.f32 %v271, %v1523
        %v1556 = vadd.f32 %v1488, %v1524
        %v1557 = vadd.f32 %v1489, %v1525
        %v1558 = vadd.f32 %v1490, %v1526
        %v1559 = vadd.f32 %v1491, %v1527
        %v1560 = vadd.f32 %v1492, %v1528
        %v1561 = vadd.f32 %v1493, %v1529
        %v1562 = vadd.f32 %v1494, %v1530
        %v1563 = vadd.f32 %v1495, %v1531
        %v1564 = vadd.f32 %v1496, %v1532
        %v1565 = vadd.f32 %v1497, %v1533
        %v1566 = vadd.f32 %v1498, %v1534
        %v1567 = vadd.f32 %v1499, %v1535
        %v1568 = vadd.f32 %v1500, %v1536
        %v1569 = vadd.f32 %v1501, %v1537
        %v1570 = vadd.f32 %v1502, %v1538
        %v1571 = vadd.f32 %v1503, %v1539
        %v1572 = vadd.f32 %v1504, %v1540
        %v1573 = vadd.f32 %v1505, %v1541
        %v1574 = vadd.f32 %v1506, %v1542
        %v1575 = vadd.f32 %v1507, %v1543
        %v1576 = vadd.f32 %v1508, %v1544
        %v1577 = vadd.f32 %v1509, %v1545
        %v1578 = vadd.f32 %v1510, %v1546
        %v1579 = vadd.f32 %v1511, %v1547
        %v1580 = vadd.f32 %v1512, %v1548
        %v1581 = vadd.f32 %v1513, %v1549
        %v1582 = vadd.f32 %v1514, %v1550
        %v1583 = vadd.f32 %v1515, %v1551
        %v1584 = vadd.f32 %v1516, %v1552
        %v1585 = vadd.f32 %v1517, %v1553
        %v1586 = vadd.f32 %v1518, %v1554
        %v1587 = vadd.f32 %v1519, %v1555
        %v1588 = vlaneseq
        %v1589 = vshrl.u32 %v1588, 7
        %v1590 = vsub.s32 7, %v1589
        %v1591 = vrot.slane %v404, %v1590
        %v1592 = vmul.f32 %v372, %v1591
        %v1593 = vmul.f32 %v277, %v1591
        %v1594 = vmul.f32 %v389, %v1591
        %v1595 = vmul.f32 %v373, %v1591
        %v1596 = vmul.f32 %v280, %v1591
        %v1597 = vmul.f32 %v390, %v1591
        %v1598 = vmul.f32 %v374, %v1591
        %v1599 = vmul.f32 %v283, %v1591
        %v1600 = vmul.f32 %v391, %v1591
        %v1601 = vmul.f32 %v375, %v1591
        %v1602 = vmul.f32 %v286, %v1591
        %v1603 = vmul.f32 %v392, %v1591
        %v1604 = vmul.f32 %v376, %v1591
        %v1605 = vmul.f32 %v289, %v1591
        %v1606 = vmul.f32 %v393, %v1591
        %v1607 = vmul.f32 %v377, %v1591
        %v1608 = vmul.f32 %v292, %v1591
        %v1609 = vmul.f32 %v394, %v1591
        %v1610 = vmul.f32 %v378, %v1591
        %v1611 = vmul.f32 %v295, %v1591
        %v1612 = vmul.f32 %v395, %v1591
        %v1613 = vmul.f32 %v379, %v1591
        %v1614 = vmul.f32 %v298, %v1591
        %v1615 = vmul.f32 %v396, %v1591
        %v1616 = vmul.f32 %v380, %v1591
        %v1617 = vmul.f32 %v301, %v1591
        %v1618 = vmul.f32 %v397, %v1591
        %v1619 = vmul.f32 %v381, %v1591
        %v1620 = vmul.f32 %v304, %v1591
        %v1621 = vmul.f32 %v398, %v1591
        %v1622 = vmul.f32 %v382, %v1591
        %v1623 = vmul.f32 %v307, %v1591
        %v1624 = vmul.f32 %v399, %v1591
        %v1625 = vmul.f32 %v383, %v1591
        %v1626 = vmul.f32 %v310, %v1591
        %v1627 = vmul.f32 %v400, %v1591
        %v1628 = vmul.f32 %v384, %v1591
        %v1629 = vmul.f32 %v313, %v1591
        %v1630 = vmul.f32 %v401, %v1591
        %v1631 = vmul.f32 %v385, %v1591
        %v1632 = vmul.f32 %v316, %v1591
        %v1633 = vmul.f32 %v402, %v1591
        %v1634 = vmul.f32 %v386, %v1591
        %v1635 = vmul.f32 %v319, %v1591
        %v1636 = vmul.f32 %v403, %v1591
        %v1637 = vmul.f32 %v370, %v1591
        %v1638 = vmul.f32 %v271, %v1591
        %v1639 = vmul.f32 %v387, %v1591
        %v1688 = vrot.slane %v1592, 1
        %v1689 = vrot.slane %v1593, 1
        %v1690 = vsel %vm574, %v1688, %v1689
        %v1691 = vrot.slane %v1594, 1
        %v1692 = vsel %vm574, %v1689, %v1691
        %v1693 = vrot.slane %v1595, 1
        %v1694 = vrot.slane %v1596, 1
        %v1695 = vsel %vm574, %v1693, %v1694
        %v1696 = vrot.slane %v1597, 1
        %v1697 = vsel %vm574, %v1694, %v1696
        %v1698 = vrot.slane %v1598, 1
        %v1699 = vrot.slane %v1599, 1
        %v1700 = vsel %vm574, %v1698, %v1699
        %v1701 = vrot.slane %v1600, 1
        %v1702 = vsel %vm574, %v1699, %v1701
        %v1703 = vrot.slane %v1601, 1
        %v1704 = vrot.slane %v1602, 1
        %v1705 = vsel %vm574, %v1703, %v1704
        %v1706 = vrot.slane %v1603, 1
        %v1707 = vsel %vm574, %v1704, %v1706
        %v1708 = vrot.slane %v1604, 1
        %v1709 = vrot.slane %v1605, 1
        %v1710 = vsel %vm574, %v1708, %v1709
        %v1711 = vrot.slane %v1606, 1
        %v1712 = vsel %vm574, %v1709, %v1711
        %v1713 = vrot.slane %v1607, 1
        %v1714 = vrot.slane %v1608, 1
        %v1715 = vsel %vm574, %v1713, %v1714
        %v1716 = vrot.slane %v1609, 1
        %v1717 = vsel %vm574, %v1714, %v1716
        %v1718 = vrot.slane %v1610, 1
        %v1719 = vrot.slane %v1611, 1
        %v1720 = vsel %vm574, %v1718, %v1719
        %v1721 = vrot.slane %v1612, 1
        %v1722 = vsel %vm574, %v1719, %v1721
        %v1723 = vrot.slane %v1613, 1
        %v1724 = vrot.slane %v1614, 1
        %v1725 = vsel %vm574, %v1723, %v1724
        %v1726 = vrot.slane %v1615, 1
        %v1727 = vsel %vm574, %v1724, %v1726
        %v1728 = vrot.slane %v1616, 1
        %v1729 = vrot.slane %v1617, 1
        %v1730 = vsel %vm574, %v1728, %v1729
        %v1731 = vrot.slane %v1618, 1
        %v1732 = vsel %vm574, %v1729, %v1731
        %v1733 = vrot.slane %v1619, 1
        %v1734 = vrot.slane %v1620, 1
        %v1735 = vsel %vm574, %v1733, %v1734
        %v1736 = vrot.slane %v1621, 1
        %v1737 = vsel %vm574, %v1734, %v1736
        %v1738 = vrot.slane %v1622, 1
        %v1739 = vrot.slane %v1623, 1
        %v1740 = vsel %vm574, %v1738, %v1739
        %v1741 = vrot.slane %v1624, 1
        %v1742 = vsel %vm574, %v1739, %v1741
        %v1743 = vrot.slane %v1625, 1
        %v1744 = vrot.slane %v1626, 1
        %v1745 = vsel %vm574, %v1743, %v1744
        %v1746 = vrot.slane %v1627, 1
        %v1747 = vsel %vm574, %v1744, %v1746
        %v1748 = vrot.slane %v1628, 1
        %v1749 = vrot.slane %v1629, 1
        %v1750 = vsel %vm574, %v1748, %v1749
        %v1751 = vrot.slane %v1630, 1
        %v1752 = vsel %vm574, %v1749, %v1751
        %v1753 = vrot.slane %v1631, 1
        %v1754 = vrot.slane %v1632, 1
        %v1755 = vsel %vm574, %v1753, %v1754
        %v1756 = vrot.slane %v1633, 1
        %v1757 = vsel %vm574, %v1754, %v1756
        %v1758 = vrot.slane %v1634, 1
        %v1759 = vrot.slane %v1635, 1
        %v1760 = vsel %vm574, %v1758, %v1759
        %v1761 = vrot.slane %v1636, 1
        %v1762 = vsel %vm574, %v1759, %v1761
        %v1763 = vrot.slane %v1637, 1
        %v1764 = vrot.slane %v1638, 1
        %v1765 = vsel %vm574, %v1763, %v1764
        %v1766 = vrot.slane %v1639, 1
        %v1767 = vsel %vm574, %v1764, %v1766
        %v1800 = vadd.f32 %v1556, %v1690
        %v1801 = vadd.f32 %v1557, %v1692
        %v1802 = vadd.f32 %v1558, %v1695
        %v1803 = vadd.f32 %v1559, %v1697
        %v1804 = vadd.f32 %v1560, %v1700
        %v1805 = vadd.f32 %v1561, %v1702
        %v1806 = vadd.f32 %v1562, %v1705
        %v1807 = vadd.f32 %v1563, %v1707
        %v1808 = vadd.f32 %v1564, %v1710
        %v1809 = vadd.f32 %v1565, %v1712
        %v1810 = vadd.f32 %v1566, %v1715
        %v1811 = vadd.f32 %v1567, %v1717
        %v1812 = vadd.f32 %v1568, %v1720
        %v1813 = vadd.f32 %v1569, %v1722
        %v1814 = vadd.f32 %v1570, %v1725
        %v1815 = vadd.f32 %v1571, %v1727
        %v1816 = vadd.f32 %v1572, %v1730
        %v1817 = vadd.f32 %v1573, %v1732
        %v1818 = vadd.f32 %v1574, %v1735
        %v1819 = vadd.f32 %v1575, %v1737
        %v1820 = vadd.f32 %v1576, %v1740
        %v1821 = vadd.f32 %v1577, %v1742
        %v1822 = vadd.f32 %v1578, %v1745
        %v1823 = vadd.f32 %v1579, %v1747
        %v1824 = vadd.f32 %v1580, %v1750
        %v1825 = vadd.f32 %v1581, %v1752
        %v1826 = vadd.f32 %v1582, %v1755
        %v1827 = vadd.f32 %v1583, %v1757
        %v1828 = vadd.f32 %v1584, %v1760
        %v1829 = vadd.f32 %v1585, %v1762
        %v1830 = vadd.f32 %v1586, %v1765
        %v1831 = vadd.f32 %v1587, %v1767
        %v1832 = vlaneseq
        %v1833 = vshrl.u32 %v1832, 7
        %v1834 = vsub.s32 0, %v1833
        %v1835 = vrot.slane %v405, %v1834
        %v1836 = vmul.f32 %v372, %v1835
        %v1837 = vmul.f32 %v277, %v1835
        %v1838 = vmul.f32 %v389, %v1835
        %v1839 = vmul.f32 %v373, %v1835
        %v1840 = vmul.f32 %v280, %v1835
        %v1841 = vmul.f32 %v390, %v1835
        %v1842 = vmul.f32 %v374, %v1835
        %v1843 = vmul.f32 %v283, %v1835
        %v1844 = vmul.f32 %v391, %v1835
        %v1845 = vmul.f32 %v375, %v1835
        %v1846 = vmul.f32 %v286, %v1835
        %v1847 = vmul.f32 %v392, %v1835
        %v1848 = vmul.f32 %v376, %v1835
        %v1849 = vmul.f32 %v289, %v1835
        %v1850 = vmul.f32 %v393, %v1835
        %v1851 = vmul.f32 %v377, %v1835
        %v1852 = vmul.f32 %v292, %v1835
        %v1853 = vmul.f32 %v394, %v1835
        %v1854 = vmul.f32 %v378, %v1835
        %v1855 = vmul.f32 %v295, %v1835
        %v1856 = vmul.f32 %v395, %v1835
        %v1857 = vmul.f32 %v379, %v1835
        %v1858 = vmul.f32 %v298, %v1835
        %v1859 = vmul.f32 %v396, %v1835
        %v1860 = vmul.f32 %v380, %v1835
        %v1861 = vmul.f32 %v301, %v1835
        %v1862 = vmul.f32 %v397, %v1835
        %v1863 = vmul.f32 %v381, %v1835
        %v1864 = vmul.f32 %v304, %v1835
        %v1865 = vmul.f32 %v398, %v1835
        %v1866 = vmul.f32 %v382, %v1835
        %v1867 = vmul.f32 %v307, %v1835
        %v1868 = vmul.f32 %v399, %v1835
        %v1869 = vmul.f32 %v383, %v1835
        %v1870 = vmul.f32 %v310, %v1835
        %v1871 = vmul.f32 %v400, %v1835
        %v1872 = vmul.f32 %v384, %v1835
        %v1873 = vmul.f32 %v313, %v1835
        %v1874 = vmul.f32 %v401, %v1835
        %v1875 = vmul.f32 %v385, %v1835
        %v1876 = vmul.f32 %v316, %v1835
        %v1877 = vmul.f32 %v402, %v1835
        %v1878 = vmul.f32 %v386, %v1835
        %v1879 = vmul.f32 %v319, %v1835
        %v1880 = vmul.f32 %v403, %v1835
        %v1881 = vmul.f32 %v370, %v1835
        %v1882 = vmul.f32 %v271, %v1835
        %v1883 = vmul.f32 %v387, %v1835
        %v1932 = vrot.slane %v1836, 2
        %v1933 = vrot.slane %v1837, 2
        %v1934 = vsel %vm819, %v1932, %v1933
        %v1935 = vrot.slane %v1838, 2
        %v1936 = vsel %vm819, %v1933, %v1935
        %v1937 = vrot.slane %v1839, 2
        %v1938 = vrot.slane %v1840, 2
        %v1939 = vsel %vm819, %v1937, %v1938
        %v1940 = vrot.slane %v1841, 2
        %v1941 = vsel %vm819, %v1938, %v1940
        %v1942 = vrot.slane %v1842, 2
        %v1943 = vrot.slane %v1843, 2
        %v1944 = vsel %vm819, %v1942, %v1943
        %v1945 = vrot.slane %v1844, 2
        %v1946 = vsel %vm819, %v1943, %v1945
        %v1947 = vrot.slane %v1845, 2
        %v1948 = vrot.slane %v1846, 2
        %v1949 = vsel %vm819, %v1947, %v1948
        %v1950 = vrot.slane %v1847, 2
        %v1951 = vsel %vm819, %v1948, %v1950
        %v1952 = vrot.slane %v1848, 2
        %v1953 = vrot.slane %v1849, 2
        %v1954 = vsel %vm819, %v1952, %v1953
        %v1955 = vrot.slane %v1850, 2
        %v1956 = vsel %vm819, %v1953, %v1955
        %v1957 = vrot.slane %v1851, 2
        %v1958 = vrot.slane %v1852, 2
        %v1959 = vsel %vm819, %v1957, %v1958
        %v1960 = vrot.slane %v1853, 2
        %v1961 = vsel %vm819, %v1958, %v1960
        %v1962 = vrot.slane %v1854, 2
        %v1963 = vrot.slane %v1855, 2
        %v1964 = vsel %vm819, %v1962, %v1963
        %v1965 = vrot.slane %v1856, 2
        %v1966 = vsel %vm819, %v1963, %v1965
        %v1967 = vrot.slane %v1857, 2
        %v1968 = vrot.slane %v1858, 2
        %v1969 = vsel %vm819, %v1967, %v1968
        %v1970 = vrot.slane %v1859, 2
        %v1971 = vsel %vm819, %v1968, %v1970
        %v1972 = vrot.slane %v1860, 2
        %v1973 = vrot.slane %v1861, 2
        %v1974 = vsel %vm819, %v1972, %v1973
        %v1975 = vrot.slane %v1862, 2
        %v1976 = vsel %vm819, %v1973, %v1975
        %v1977 = vrot.slane %v1863, 2
        %v1978 = vrot.slane %v1864, 2
        %v1979 = vsel %vm819, %v1977, %v1978
        %v1980 = vrot.slane %v1865, 2
        %v1981 = vsel %vm819, %v1978, %v1980
        %v1982 = vrot.slane %v1866, 2
        %v1983 = vrot.slane %v1867, 2
        %v1984 = vsel %vm819, %v1982, %v1983
        %v1985 = vrot.slane %v1868, 2
        %v1986 = vsel %vm819, %v1983, %v1985
        %v1987 = vrot.slane %v1869, 2
        %v1988 = vrot.slane %v1870, 2
        %v1989 = vsel %vm819, %v1987, %v1988
        %v1990 = vrot.slane %v1871, 2
        %v1991 = vsel %vm819, %v1988, %v1990
        %v1992 = vrot.slane %v1872, 2
        %v1993 = vrot.slane %v1873, 2
        %v1994 = vsel %vm819, %v1992, %v1993
        %v1995 = vrot.slane %v1874, 2
        %v1996 = vsel %vm819, %v1993, %v1995
        %v1997 = vrot.slane %v1875, 2
        %v1998 = vrot.slane %v1876, 2
        %v1999 = vsel %vm819, %v1997, %v1998
        %v2000 = vrot.slane %v1877, 2
        %v2001 = vsel %vm819, %v1998, %v2000
        %v2002 = vrot.slane %v1878, 2
        %v2003 = vrot.slane %v1879, 2
        %v2004 = vsel %vm819, %v2002, %v2003
        %v2005 = vrot.slane %v1880, 2
        %v2006 = vsel %vm819, %v2003, %v2005
        %v2007 = vrot.slane %v1881, 2
        %v2008 = vrot.slane %v1882, 2
        %v2009 = vsel %vm819, %v2007, %v2008
        %v2010 = vrot.slane %v1883, 2
        %v2011 = vsel %vm819, %v2008, %v2010
        %v2044 = vadd.f32 %v1800, %v1934
        %v2045 = vadd.f32 %v1801, %v1936
        %v2046 = vadd.f32 %v1802, %v1939
        %v2047 = vadd.f32 %v1803, %v1941
        %v2048 = vadd.f32 %v1804, %v1944
        %v2049 = vadd.f32 %v1805, %v1946
        %v2050 = vadd.f32 %v1806, %v1949
        %v2051 = vadd.f32 %v1807, %v1951
        %v2052 = vadd.f32 %v1808, %v1954
        %v2053 = vadd.f32 %v1809, %v1956
        %v2054 = vadd.f32 %v1810, %v1959
        %v2055 = vadd.f32 %v1811, %v1961
        %v2056 = vadd.f32 %v1812, %v1964
        %v2057 = vadd.f32 %v1813, %v1966
        %v2058 = vadd.f32 %v1814, %v1969
        %v2059 = vadd.f32 %v1815, %v1971
        %v2060 = vadd.f32 %v1816, %v1974
        %v2061 = vadd.f32 %v1817, %v1976
        %v2062 = vadd.f32 %v1818, %v1979
        %v2063 = vadd.f32 %v1819, %v1981
        %v2064 = vadd.f32 %v1820, %v1984
        %v2065 = vadd.f32 %v1821, %v1986
        %v2066 = vadd.f32 %v1822, %v1989
        %v2067 = vadd.f32 %v1823, %v1991
        %v2068 = vadd.f32 %v1824, %v1994
        %v2069 = vadd.f32 %v1825, %v1996
        %v2070 = vadd.f32 %v1826, %v1999
        %v2071 = vadd.f32 %v1827, %v2001
        %v2072 = vadd.f32 %v1828, %v2004
        %v2073 = vadd.f32 %v1829, %v2006
        %v2074 = vadd.f32 %v1830, %v2009
        %v2075 = vadd.f32 %v1831, %v2011
        %v2076 = vld [vmem:[%s2] sm:$0x1]
        %v2078 = vlaneseq
        %v2079 = vshrl.u32 %v2078, 7
        %v2080 = vsub.s32 0, %v2079
        %v2081 = vrot.slane %v2076, %v2080
        %v2083 = vadd.f32 %v2044, %v2081
        %v2084 = vadd.f32 %v2045, %v2081
        %v2085 = vadd.f32 %v2046, %v2081
        %v2086 = vadd.f32 %v2047, %v2081
        %v2087 = vadd.f32 %v2048, %v2081
        %v2088 = vadd.f32 %v2049, %v2081
        %v2089 = vadd.f32 %v2050, %v2081
        %v2090 = vadd.f32 %v2051, %v2081
        %v2091 = vadd.f32 %v2052, %v2081
        %v2092 = vadd.f32 %v2053, %v2081
        %v2093 = vadd.f32 %v2054, %v2081
        %v2094 = vadd.f32 %v2055, %v2081
        %v2095 = vadd.f32 %v2056, %v2081
        %v2096 = vadd.f32 %v2057, %v2081
        %v2097 = vadd.f32 %v2058, %v2081
        %v2098 = vadd.f32 %v2059, %v2081
        %v2099 = vadd.f32 %v2060, %v2081
        %v2100 = vadd.f32 %v2061, %v2081
        %v2101 = vadd.f32 %v2062, %v2081
        %v2102 = vadd.f32 %v2063, %v2081
        %v2103 = vadd.f32 %v2064, %v2081
        %v2104 = vadd.f32 %v2065, %v2081
        %v2105 = vadd.f32 %v2066, %v2081
        %v2106 = vadd.f32 %v2067, %v2081
        %v2107 = vadd.f32 %v2068, %v2081
        %v2108 = vadd.f32 %v2069, %v2081
        %v2109 = vadd.f32 %v2070, %v2081
        %v2110 = vadd.f32 %v2071, %v2081
        %v2111 = vadd.f32 %v2072, %v2081
        %v2112 = vadd.f32 %v2073, %v2081
        %v2113 = vadd.f32 %v2074, %v2081
        %v2114 = vadd.f32 %v2075, %v2081
        %vm2115 = vcmask 523264
        %2116 = vst.msk [vmem:[%s203] sm:$0xff] %vm2115, %v2083
        %2117 = vst.msk [vmem:[%s203 + $0x8] sm:$0xff] %vm2115, %v2084
        %2118 = vst.msk [vmem:[%s203 + $0x10] sm:$0xff] %vm2115, %v2085
        %2119 = vst.msk [vmem:[%s203 + $0x18] sm:$0xff] %vm2115, %v2086
        %2120 = vst.msk [vmem:[%s203 + $0x20] sm:$0xff] %vm2115, %v2087
        %2121 = vst.msk [vmem:[%s203 + $0x28] sm:$0xff] %vm2115, %v2088
        %2122 = vst.msk [vmem:[%s203 + $0x30] sm:$0xff] %vm2115, %v2089
        %2123 = vst.msk [vmem:[%s203 + $0x38] sm:$0xff] %vm2115, %v2090
        %2124 = vst.msk [vmem:[%s203 + $0x40] sm:$0xff] %vm2115, %v2091
        %2125 = vst.msk [vmem:[%s203 + $0x48] sm:$0xff] %vm2115, %v2092
        %2126 = vst.msk [vmem:[%s203 + $0x50] sm:$0xff] %vm2115, %v2093
        %2127 = vst.msk [vmem:[%s203 + $0x58] sm:$0xff] %vm2115, %v2094
        %2128 = vst.msk [vmem:[%s203 + $0x60] sm:$0xff] %vm2115, %v2095
        %2129 = vst.msk [vmem:[%s203 + $0x68] sm:$0xff] %vm2115, %v2096
        %2130 = vst.msk [vmem:[%s203 + $0x70] sm:$0xff] %vm2115, %v2097
        %2131 = vst.msk [vmem:[%s203 + $0x78] sm:$0xff] %vm2115, %v2098
        %2132 = vst.msk [vmem:[%s203 + $0x80] sm:$0xff] %vm2115, %v2099
        %2133 = vst.msk [vmem:[%s203 + $0x88] sm:$0xff] %vm2115, %v2100
        %2134 = vst.msk [vmem:[%s203 + $0x90] sm:$0xff] %vm2115, %v2101
        %2135 = vst.msk [vmem:[%s203 + $0x98] sm:$0xff] %vm2115, %v2102
        %2136 = vst.msk [vmem:[%s203 + $0xa0] sm:$0xff] %vm2115, %v2103
        %2137 = vst.msk [vmem:[%s203 + $0xa8] sm:$0xff] %vm2115, %v2104
        %2138 = vst.msk [vmem:[%s203 + $0xb0] sm:$0xff] %vm2115, %v2105
        %2139 = vst.msk [vmem:[%s203 + $0xb8] sm:$0xff] %vm2115, %v2106
        %2140 = vst.msk [vmem:[%s203 + $0xc0] sm:$0xff] %vm2115, %v2107
        %2141 = vst.msk [vmem:[%s203 + $0xc8] sm:$0xff] %vm2115, %v2108
        %2142 = vst.msk [vmem:[%s203 + $0xd0] sm:$0xff] %vm2115, %v2109
        %2143 = vst.msk [vmem:[%s203 + $0xd8] sm:$0xff] %vm2115, %v2110
        %2144 = vst.msk [vmem:[%s203 + $0xe0] sm:$0xff] %vm2115, %v2111
        %2145 = vst.msk [vmem:[%s203 + $0xe8] sm:$0xff] %vm2115, %v2112
        %2146 = vst.msk [vmem:[%s203 + $0xf0] sm:$0xff] %vm2115, %v2113
        %2147 = vst.msk [vmem:[%s203 + $0xf8] sm:$0xff] %vm2115, %v2114
        %s2148 = sand.u32 %s97, 1
        %s2149 = scalar_lea.sflag [#allocation4], %s2148
        %s2150 = sand.u32 %s97, 1
        %s2151 = smul.addr %s2150, 256
        %s2152 = scalar_lea.vmem [#allocation7], %s2151
        // Predicated region
        $region41: #{tpu_custom_call.1} parent=31 // pred_check
          %p2153 = pneg %p107
        $region42: #{tpu_custom_call.1} parent=31 // pred_check_branch
          %2155 = sbr.rel (%p2153) target = $region44
        $region43: #{tpu_custom_call.1} parent=31 // pred_region
          %s2157 = ssub.s32 4096, 4096
          %2158 = vsyncadd %s2149, %s2157
          %s2159 = smul.addr %s21, 32
          %s2160 = smul.addr %s2159, 128
          %s2161 = scalar_lea.hbm %s3, %s2160
          %s2162 = sshll.u32 %s2152, 4
          %s2163 = int_to_ptr.vmem [resolvable:$true] %s2162
          %2168 = dma.vmem_to_hbm [thread:$0]  %s2163, 4096, %s2161, %s2149, 128, 128, 8
        $region44: #{tpu_custom_call.1} parent=31 // pred_fallthru
          _
      $region32: #{tpu_custom_call.1} parent=5 // pred_fallthru
        _
      %p2169 = scmp.le.s32.totalorder 2, %s16
      // Predicated region
      $region45: #{tpu_custom_call.1} parent=5 // pred_check
        %p2170 = pneg %p2169
      $region46: #{tpu_custom_call.1} parent=5 // pred_check_branch
        %2172 = sbr.rel (%p2170) target = $region48
      $region47: #{tpu_custom_call.1} parent=5 // pred_region
        %s2173 = ssub.s32 %s16, 2
        // Predicated region
        $region49: #{tpu_custom_call.1} parent=47 // pred_check
          %p2174 = pneg %p113
        $region50: #{tpu_custom_call.1} parent=47 // pred_check_branch
          %2176 = sbr.rel (%p2174) target = $region52
        $region51: #{tpu_custom_call.1} parent=47 // pred_region
          %s2177 = sand.u32 %s98, 1
          %s2178 = scalar_lea.sflag [#allocation4], %s2177
          %s2179 = sand.u32 %s98, 1
          %s2180 = smul.addr %s2179, 256
          %s2181 = scalar_lea.vmem [#allocation7], %s2180
          %2182 = dma.done %s2178, 4096
        $region52: #{tpu_custom_call.1} parent=47 // pred_fallthru
          _
      $region48: #{tpu_custom_call.1} parent=5 // pred_fallthru
        _
    $region6: #{tpu_custom_call.1} parent=1 // loop_footer
      %s20 = sadd.s32 1, %s16
    $region7: #{tpu_custom_call.1} parent=1 // loop_footer_branch
      %15 = sbr.rel target = $region3
    $region8: #{tpu_custom_call.1} parent=1 // loop_exit
      _
    %2183 = vsyncpa [#allocation3], 1
    %s2184 = scalar_lea.sflag [#allocation3], 1
    %2185 = vsyncpa %s2184, 1
    %2186 = vsyncpa [#allocation6], 1
    %2187 = vsyncpa [#allocation4], 1
    %s2188 = scalar_lea.sflag [#allocation4], 1
    %2189 = vsyncpa %s2188, 1

</llo_original>
